<compile_context>
chip_gen: v5e
topology: v5e:2x2
jax: 0.10.0
libtpu: 0.0.40
codegen_flags: <defaults>
</compile_context>

<pallas_src>
import jax
import jax.numpy as jnp
from jax.experimental import pallas as pl
from jax.experimental.pallas import tpu as pltpu

LANES = 128   # pad all output-channel dims to one full vreg lane width
K1_PAD = 32   # conv1 contraction 5*5*1 = 25  -> padded to 32
K2_PAD = 160  # conv2 contraction 5*5*6 = 150 -> padded to 160


# ---------------- Pallas kernels ----------------

def _conv_pool_kernel(cols_ref, w_ref, b_ref, o_ref):
    """Fused conv-as-matmul + folded-BN bias + ReLU + 2x2 maxpool.

    cols_ref: (1, R, K)      im2col rows in window-major order (4 groups of R/4)
    w_ref:    (K, 128)       folded conv weights (bf16, channel-padded)
    b_ref:    (1, 128)       folded bias (f32, padded entries are 0)
    o_ref:    (1, R/4, 128)  pooled activations (bf16)
    """
    y = jnp.dot(cols_ref[0], w_ref[...], preferred_element_type=jnp.float32)
    y = jnp.maximum(y + b_ref[...], 0.0)
    r = y.shape[0] // 4
    pooled = jnp.maximum(jnp.maximum(y[0 * r:1 * r], y[1 * r:2 * r]),
                         jnp.maximum(y[2 * r:3 * r], y[3 * r:4 * r]))
    o_ref[0] = pooled.astype(o_ref.dtype)


def _fc_tail_kernel(x_ref, w1_ref, b1_ref, w2_ref, b2_ref, w3_ref, b3_ref,
                    o_ref):
    """fc1+bn3+relu -> fc2+bn4+relu -> fc3, all intermediates stay on-chip."""
    y = jnp.dot(x_ref[...], w1_ref[...], preferred_element_type=jnp.float32)
    y = jnp.maximum(y + b1_ref[...], 0.0).astype(w2_ref.dtype)
    y = jnp.dot(y, w2_ref[...], preferred_element_type=jnp.float32)
    y = jnp.maximum(y + b2_ref[...], 0.0).astype(w3_ref.dtype)
    y = jnp.dot(y, w3_ref[...], preferred_element_type=jnp.float32)
    o_ref[...] = (y + b3_ref[...]).astype(o_ref.dtype)


# ---------------- Pallas wrappers ----------------

def conv_pool_stage(cols, w_pad, b_pad):
    n, r, k = cols.shape
    lanes = w_pad.shape[1]
    return pl.pallas_call(
        _conv_pool_kernel,
        grid=(n,),
        in_specs=[
            pl.BlockSpec((1, r, k), lambda i: (i, 0, 0)),
            pl.BlockSpec((k, lanes), lambda i: (0, 0)),
            pl.BlockSpec((1, lanes), lambda i: (0, 0)),
        ],
        out_specs=pl.BlockSpec((1, r // 4, lanes), lambda i: (i, 0, 0)),
        out_shape=jax.ShapeDtypeStruct((n, r // 4, lanes), jnp.bfloat16),
        compiler_params=pltpu.CompilerParams(
            dimension_semantics=("parallel",)),   # v7x: use both TensorCores
    )(cols, w_pad, b_pad)


def fc_tail(flat, w):
    n = flat.shape[0]
    return pl.pallas_call(
        _fc_tail_kernel,
        out_shape=jax.ShapeDtypeStruct((n, LANES), jnp.float32),
    )(flat.astype(jnp.bfloat16),
      w["wf1"], w["bf1"], w["wf2"], w["bf2"], w["wf3"], w["bf3"])


# ---------------- JAX glue ----------------

def im2col_pool_major(x, kh, kw):
    """Valid 5x5 patches, rows ordered (wi, wj, oh/2, ow/2) so a 2x2 maxpool
    after the conv matmul is a max over 4 contiguous row groups.
    Requires even conv-output spatial dims (24x24 and 8x8 here)."""
    n, h, w, c = x.shape
    oh, ow = h - kh + 1, w - kw + 1
    cols = [x[:, i:i + oh, j:j + ow, :] for i in range(kh) for j in range(kw)]
    pmat = jnp.stack(cols, axis=3).reshape(n, oh, ow, kh * kw * c)
    pmat = pmat.reshape(n, oh // 2, 2, ow // 2, 2, kh * kw * c)
    pmat = pmat.transpose(0, 2, 4, 1, 3, 5)        # (N, wi, wj, OH/2, OW/2, K)
    return (pmat.reshape(n, 4 * (oh // 2) * (ow // 2), kh * kw * c),
            (oh // 2, ow // 2))


def fold_bn(w, b, bn_params, eps=1e-5):
    gamma, beta, mean, var = bn_params
    s = gamma / jnp.sqrt(var + eps)
    return w * s[None, :], (b - mean) * s + beta


def _pad2(a, rows, cols):
    r, c = a.shape
    return jnp.pad(a, ((0, rows - r), (0, cols - c)))


def prepare_weights(p):
    """Fold BN, pad contraction dims to multiples of 8 and output dims to 128
    lanes, cast matmul operands to bf16 (biases stay f32)."""
    w1, b1 = fold_bn(p["conv1_w"], p["conv1_b"], p["bn1"])
    w2, b2 = fold_bn(p["conv2_w"], p["conv2_b"], p["bn2"])
    f1, c1 = fold_bn(p["fc1_w"], p["fc1_b"], p["bn3"])
    f2, c2 = fold_bn(p["fc2_w"], p["fc2_b"], p["bn4"])
    f3, c3 = p["fc3_w"], p["fc3_b"]
    return {
        "w1": _pad2(w1, K1_PAD, LANES).astype(jnp.bfloat16),
        "b1": _pad2(b1[None, :], 1, LANES),
        "w2": _pad2(w2, K2_PAD, LANES).astype(jnp.bfloat16),
        "b2": _pad2(b2[None, :], 1, LANES),
        "wf1": _pad2(f1, 256, LANES).astype(jnp.bfloat16),
        "bf1": _pad2(c1[None, :], 1, LANES),
        "wf2": _pad2(f2, LANES, LANES).astype(jnp.bfloat16),
        "bf2": _pad2(c2[None, :], 1, LANES),
        "wf3": _pad2(f3, LANES, LANES).astype(jnp.bfloat16),
        "bf3": _pad2(c3[None, :], 1, LANES),
    }


def example_net_forward(x_nchw, params):
    w = prepare_weights(params)
    n = x_nchw.shape[0]
    x = jnp.transpose(x_nchw, (0, 2, 3, 1))                     # NCHW -> NHWC

    # stage 1: conv1 + bn1 + relu + maxpool (one kernel)
    cols1, (ph1, pw1) = im2col_pool_major(x, 5, 5)              # (N, 576, 25)
    cols1 = jnp.pad(cols1, ((0, 0), (0, 0), (0, K1_PAD - cols1.shape[2])))
    y1 = conv_pool_stage(cols1.astype(jnp.bfloat16), w["w1"], w["b1"])

    # stage 2: conv2 + bn2 + relu + maxpool (one kernel)
    a1 = y1.reshape(n, ph1, pw1, LANES)[..., :6]                # (N, 12, 12, 6)
    cols2, _ = im2col_pool_major(a1, 5, 5)                      # (N, 64, 150)
    cols2 = jnp.pad(cols2, ((0, 0), (0, 0), (0, K2_PAD - cols2.shape[2])))
    y2 = conv_pool_stage(cols2, w["w2"], w["b2"])               # (N, 16, 128)

    # FC tail: flatten (NHWC order) + fc1/bn3/relu + fc2/bn4/relu + fc3
    flat = y2[:, :, :16].reshape(n, 16 * 16)                    # (N, 256)
    logits = fc_tail(flat, w)                                   # (N, 128)
    return logits[:, :10]


# ---------------- Pure-JAX references (validation) ----------------

def reference_forward_pipeline(x_nchw, params):
    """Mirror of the Pallas pipeline (bf16 operands, f32 accumulation)."""
    w = prepare_weights(params)
    n = x_nchw.shape[0]
    x = jnp.transpose(x_nchw, (0, 2, 3, 1))

    def stage(cols, wp, bp):
        y = jnp.matmul(cols.astype(jnp.float32), wp.astype(jnp.float32))
        y = jnp.maximum(y + bp[None], 0.0)
        r = y.shape[1] // 4
        return y.reshape(n, 4, r, LANES).max(axis=1).astype(jnp.bfloat16)

    cols1, (ph1, pw1) = im2col_pool_major(x, 5, 5)
    cols1 = jnp.pad(cols1, ((0, 0), (0, 0), (0, K1_PAD - cols1.shape[2])))
    y1 = stage(cols1.astype(jnp.bfloat16), w["w1"], w["b1"])
    a1 = y1.reshape(n, ph1, pw1, LANES)[..., :6]
    cols2, _ = im2col_pool_major(a1, 5, 5)
    cols2 = jnp.pad(cols2, ((0, 0), (0, 0), (0, K2_PAD - cols2.shape[2])))
    y2 = stage(cols2, w["w2"], w["b2"])
    flat = y2[:, :, :16].reshape(n, 256).astype(jnp.float32)
    h = jnp.maximum(flat @ w["wf1"].astype(jnp.float32) + w["bf1"], 0.0)
    h = h.astype(jnp.bfloat16).astype(jnp.float32)
    h = jnp.maximum(h @ w["wf2"].astype(jnp.float32) + w["bf2"], 0.0)
    h = h.astype(jnp.bfloat16).astype(jnp.float32)
    out = h @ w["wf3"].astype(jnp.float32) + w["bf3"]
    return out[:, :10]


def reference_forward_f32(x_nchw, p):
    """Straightforward f32 LeNet forward (eval-mode BN); layout-independent
    structural check."""
    def conv(x, w_flat, b, kh, kw):
        n, h, wd, c = x.shape
        oh, ow = h - kh + 1, wd - kw + 1
        cols = [x[:, i:i + oh, j:j + ow, :] for i in range(kh) for j in range(kw)]
        pmat = jnp.stack(cols, axis=3).reshape(n, oh, ow, kh * kw * c)
        return pmat @ w_flat + b

    def bn(x, prm, eps=1e-5):
        g, b, m, v = prm
        return (x - m) / jnp.sqrt(v + eps) * g + b

    def pool(x):
        n, h, w, c = x.shape
        return x.reshape(n, h // 2, 2, w // 2, 2, c).max(axis=(2, 4))

    x = jnp.transpose(x_nchw, (0, 2, 3, 1))
    y = pool(jnp.maximum(bn(conv(x, p["conv1_w"], p["conv1_b"], 5, 5), p["bn1"]), 0.0))
    y = pool(jnp.maximum(bn(conv(y, p["conv2_w"], p["conv2_b"], 5, 5), p["bn2"]), 0.0))
    y = y.reshape(y.shape[0], -1)
    y = jnp.maximum(bn(y @ p["fc1_w"] + p["fc1_b"], p["bn3"]), 0.0)
    y = jnp.maximum(bn(y @ p["fc2_w"] + p["fc2_b"], p["bn4"]), 0.0)
    return y @ p["fc3_w"] + p["fc3_b"]


# ---------------- Parameter init (synthetic, deterministic) ----------------

def init_params(key):
    ks = jax.random.split(key, 14)

    def rn(k, shape, scale=0.1):
        return scale * jax.random.normal(k, shape, jnp.float32)

    def bn(k, n):
        k1, k2, k3, k4 = jax.random.split(k, 4)
        gamma = 1.0 + 0.1 * jax.random.normal(k1, (n,), jnp.float32)
        beta = 0.1 * jax.random.normal(k2, (n,), jnp.float32)
        mean = 0.1 * jax.random.normal(k3, (n,), jnp.float32)
        var = 0.5 + 0.1 * jnp.abs(jax.random.normal(k4, (n,), jnp.float32))
        return (gamma, beta, mean, var)

    return {
        # conv weights stored pre-flattened (kh*kw*cin, cout), (kh, kw, cin) order
        "conv1_w": rn(ks[0], (5 * 5 * 1, 6)),  "conv1_b": rn(ks[1], (6,)),
        "bn1": bn(ks[2], 6),
        "conv2_w": rn(ks[3], (5 * 5 * 6, 16)), "conv2_b": rn(ks[4], (16,)),
        "bn2": bn(ks[5], 16),
        # fc1 defined against NHWC flatten order ((h*4+w)*16 + c)
        "fc1_w": rn(ks[6], (16 * 4 * 4, 120)), "fc1_b": rn(ks[7], (120,)),
        "bn3": bn(ks[8], 120),
        "fc2_w": rn(ks[9], (120, 84)),         "fc2_b": rn(ks[10], (84,)),
        "bn4": bn(ks[11], 84),
        "fc3_w": rn(ks[12], (84, 10)),         "fc3_b": rn(ks[13], (10,)),
    }


if __name__ == "__main__":
    key = jax.random.PRNGKey(0)
    kx, kp = jax.random.split(key)
    params = init_params(kp)
    # Input spatial size 28x28 is implied by fc1 = Linear(16*4*4, 120).
    x = jax.random.normal(kx, (2, 1, 28, 28), jnp.float32)

    out = jax.jit(example_net_forward)(x, params)
    out = jax.block_until_ready(out)
    assert out.shape == (2, 10), out.shape

    # Tight check vs. an identical-arithmetic pure-JAX mirror (bf16 operands).
    ref_pipe = reference_forward_pipeline(x, params)
    assert jnp.allclose(out, ref_pipe, atol=1e-2, rtol=1e-2), (
        float(jnp.max(jnp.abs(out - ref_pipe))))

    # Structural check vs. plain f32 LeNet (loose tolerance: bf16 operands).
    ref_f32 = reference_forward_f32(x, params)
    assert jnp.allclose(out, ref_f32, atol=1e-1, rtol=1e-1), (
        float(jnp.max(jnp.abs(out - ref_f32))))

    print("KERNEL_OK")
</pallas_src>

<mosaic_0001>
module attributes {stable_mosaic.version = 11 : i64} {
  func.func @_conv_pool_kernel(%arg0: i32, %arg1: memref<1x576x32xbf16, #tpu.memory_space<vmem>>, %arg2: memref<32x128xbf16, #tpu.memory_space<vmem>>, %arg3: memref<1x128xf32, #tpu.memory_space<vmem>>, %arg4: memref<1x144x128xbf16, #tpu.memory_space<vmem>>) attributes {dimension_semantics = [#tpu.dimension_semantics<parallel>], iteration_bounds = array<i64: 2>, scalar_prefetch = 0 : i64, scratch_operands = 0 : i64, tpu.core_type = #tpu.core_type<tc>, window_params = [{transform_indices = @transform_0, window_bounds = array<i64: 1, 576, 32>}, {pipeline_mode = #tpu.pipeline_mode<synchronous>, transform_indices = @transform_1, window_bounds = array<i64: 32, 128>}, {pipeline_mode = #tpu.pipeline_mode<synchronous>, transform_indices = @transform_2, window_bounds = array<i64: 1, 128>}, {transform_indices = @transform_3, window_bounds = array<i64: 1, 144, 128>}]} {
    %c0 = arith.constant 0 : index
    %c0_0 = arith.constant 0 : index
    %c0_1 = arith.constant 0 : index
    %0 = vector.load %arg1[%c0, %c0_0, %c0_1] : memref<1x576x32xbf16, #tpu.memory_space<vmem>>, vector<1x576x32xbf16>
    %1 = vector.shape_cast %0 : vector<1x576x32xbf16> to vector<576x32xbf16>
    %c0_2 = arith.constant 0 : index
    %c0_3 = arith.constant 0 : index
    %2 = vector.load %arg2[%c0_2, %c0_3] : memref<32x128xbf16, #tpu.memory_space<vmem>>, vector<32x128xbf16>
    %cst = arith.constant dense<0.000000e+00> : vector<576x128xf32>
    %3 = tpu.matmul %1, %2, %cst {dimension_numbers = #tpu.dot_dimension_numbers<[1], [0], [0], [1], [0, 0, 1, 1], [], []>} : vector<576x32xbf16>, vector<32x128xbf16>, vector<576x128xf32> -> vector<576x128xf32>
    %c0_4 = arith.constant 0 : index
    %c0_5 = arith.constant 0 : index
    %4 = vector.load %arg3[%c0_4, %c0_5] : memref<1x128xf32, #tpu.memory_space<vmem>>, vector<1x128xf32>
    %5 = vector.broadcast %4 : vector<1x128xf32> to vector<576x128xf32>
    %6 = arith.addf %3, %5 : vector<576x128xf32>
    %cst_6 = arith.constant 0.000000e+00 : f32
    %7 = vector.broadcast %cst_6 : f32 to vector<576x128xf32>
    %8 = arith.maximumf %6, %7 : vector<576x128xf32>
    %9 = vector.extract_strided_slice %8 {offsets = [0, 0], sizes = [144, 128], strides = [1, 1]} : vector<576x128xf32> to vector<144x128xf32>
    %10 = vector.extract_strided_slice %8 {offsets = [144, 0], sizes = [144, 128], strides = [1, 1]} : vector<576x128xf32> to vector<144x128xf32>
    %11 = arith.maximumf %9, %10 : vector<144x128xf32>
    %12 = vector.extract_strided_slice %8 {offsets = [288, 0], sizes = [144, 128], strides = [1, 1]} : vector<576x128xf32> to vector<144x128xf32>
    %13 = vector.extract_strided_slice %8 {offsets = [432, 0], sizes = [144, 128], strides = [1, 1]} : vector<576x128xf32> to vector<144x128xf32>
    %14 = arith.maximumf %12, %13 : vector<144x128xf32>
    %15 = arith.maximumf %11, %14 : vector<144x128xf32>
    %16 = arith.truncf %15 : vector<144x128xf32> to vector<144x128xbf16>
    %c0_7 = arith.constant 0 : index
    %c0_8 = arith.constant 0 : index
    %c0_9 = arith.constant 0 : index
    %17 = vector.load %arg4[%c0_7, %c0_8, %c0_9] : memref<1x144x128xbf16, #tpu.memory_space<vmem>>, vector<1x144x128xbf16>
    %18 = vector.shape_cast %17 : vector<1x144x128xbf16> to vector<144x128xbf16>
    %19 = vector.shape_cast %16 : vector<144x128xbf16> to vector<1x144x128xbf16>
    tpu.vector_store %arg4[%c0_7, %c0_8, %c0_9], %19 {strides = array<i32>} : memref<1x144x128xbf16, #tpu.memory_space<vmem>>, vector<1x144x128xbf16>,
    return
  }
  func.func @transform_0(%arg0: i32) -> (i32, i32, i32) {
    %c0_i32 = arith.constant 0 : i32
    %c0_i32_0 = arith.constant 0 : i32
    %c0_i32_1 = arith.constant 0 : i32
    return %arg0, %c0_i32, %c0_i32_0 : i32, i32, i32
  }
  func.func @transform_1(%arg0: i32) -> (i32, i32) {
    %c0_i32 = arith.constant 0 : i32
    %c0_i32_0 = arith.constant 0 : i32
    %c0_i32_1 = arith.constant 0 : i32
    return %c0_i32, %c0_i32_0 : i32, i32
  }
  func.func @transform_2(%arg0: i32) -> (i32, i32) {
    %c0_i32 = arith.constant 0 : i32
    %c0_i32_0 = arith.constant 0 : i32
    %c0_i32_1 = arith.constant 0 : i32
    return %c0_i32, %c0_i32_0 : i32, i32
  }
  func.func @transform_3(%arg0: i32) -> (i32, i32, i32) {
    %c0_i32 = arith.constant 0 : i32
    %c0_i32_0 = arith.constant 0 : i32
    %c0_i32_1 = arith.constant 0 : i32
    return %arg0, %c0_i32, %c0_i32_0 : i32, i32, i32
  }
}

module attributes {stable_mosaic.version = 11 : i64} {
  func.func @_conv_pool_kernel(%arg0: i32, %arg1: memref<1x64x160xbf16, #tpu.memory_space<vmem>>, %arg2: memref<160x128xbf16, #tpu.memory_space<vmem>>, %arg3: memref<1x128xf32, #tpu.memory_space<vmem>>, %arg4: memref<1x16x128xbf16, #tpu.memory_space<vmem>>) attributes {dimension_semantics = [#tpu.dimension_semantics<parallel>], iteration_bounds = array<i64: 2>, scalar_prefetch = 0 : i64, scratch_operands = 0 : i64, tpu.core_type = #tpu.core_type<tc>, window_params = [{transform_indices = @transform_0, window_bounds = array<i64: 1, 64, 160>}, {pipeline_mode = #tpu.pipeline_mode<synchronous>, transform_indices = @transform_1, window_bounds = array<i64: 160, 128>}, {pipeline_mode = #tpu.pipeline_mode<synchronous>, transform_indices = @transform_2, window_bounds = array<i64: 1, 128>}, {transform_indices = @transform_3, window_bounds = array<i64: 1, 16, 128>}]} {
    %c0 = arith.constant 0 : index
    %c0_0 = arith.constant 0 : index
    %c0_1 = arith.constant 0 : index
    %0 = vector.load %arg1[%c0, %c0_0, %c0_1] : memref<1x64x160xbf16, #tpu.memory_space<vmem>>, vector<1x64x160xbf16>
    %1 = vector.shape_cast %0 : vector<1x64x160xbf16> to vector<64x160xbf16>
    %c0_2 = arith.constant 0 : index
    %c0_3 = arith.constant 0 : index
    %2 = vector.load %arg2[%c0_2, %c0_3] : memref<160x128xbf16, #tpu.memory_space<vmem>>, vector<160x128xbf16>
    %cst = arith.constant dense<0.000000e+00> : vector<64x128xf32>
    %3 = tpu.matmul %1, %2, %cst {dimension_numbers = #tpu.dot_dimension_numbers<[1], [0], [0], [1], [0, 0, 1, 1], [], []>} : vector<64x160xbf16>, vector<160x128xbf16>, vector<64x128xf32> -> vector<64x128xf32>
    %c0_4 = arith.constant 0 : index
    %c0_5 = arith.constant 0 : index
    %4 = vector.load %arg3[%c0_4, %c0_5] : memref<1x128xf32, #tpu.memory_space<vmem>>, vector<1x128xf32>
    %5 = vector.broadcast %4 : vector<1x128xf32> to vector<64x128xf32>
    %6 = arith.addf %3, %5 : vector<64x128xf32>
    %cst_6 = arith.constant 0.000000e+00 : f32
    %7 = vector.broadcast %cst_6 : f32 to vector<64x128xf32>
    %8 = arith.maximumf %6, %7 : vector<64x128xf32>
    %9 = vector.extract_strided_slice %8 {offsets = [0, 0], sizes = [16, 128], strides = [1, 1]} : vector<64x128xf32> to vector<16x128xf32>
    %10 = vector.extract_strided_slice %8 {offsets = [16, 0], sizes = [16, 128], strides = [1, 1]} : vector<64x128xf32> to vector<16x128xf32>
    %11 = arith.maximumf %9, %10 : vector<16x128xf32>
    %12 = vector.extract_strided_slice %8 {offsets = [32, 0], sizes = [16, 128], strides = [1, 1]} : vector<64x128xf32> to vector<16x128xf32>
    %13 = vector.extract_strided_slice %8 {offsets = [48, 0], sizes = [16, 128], strides = [1, 1]} : vector<64x128xf32> to vector<16x128xf32>
    %14 = arith.maximumf %12, %13 : vector<16x128xf32>
    %15 = arith.maximumf %11, %14 : vector<16x128xf32>
    %16 = arith.truncf %15 : vector<16x128xf32> to vector<16x128xbf16>
    %c0_7 = arith.constant 0 : index
    %c0_8 = arith.constant 0 : index
    %c0_9 = arith.constant 0 : index
    %17 = vector.load %arg4[%c0_7, %c0_8, %c0_9] : memref<1x16x128xbf16, #tpu.memory_space<vmem>>, vector<1x16x128xbf16>
    %18 = vector.shape_cast %17 : vector<1x16x128xbf16> to vector<16x128xbf16>
    %19 = vector.shape_cast %16 : vector<16x128xbf16> to vector<1x16x128xbf16>
    tpu.vector_store %arg4[%c0_7, %c0_8, %c0_9], %19 {strides = array<i32>} : memref<1x16x128xbf16, #tpu.memory_space<vmem>>, vector<1x16x128xbf16>,
    return
  }
  func.func @transform_0(%arg0: i32) -> (i32, i32, i32) {
    %c0_i32 = arith.constant 0 : i32
    %c0_i32_0 = arith.constant 0 : i32
    %c0_i32_1 = arith.constant 0 : i32
    return %arg0, %c0_i32, %c0_i32_0 : i32, i32, i32
  }
  func.func @transform_1(%arg0: i32) -> (i32, i32) {
    %c0_i32 = arith.constant 0 : i32
    %c0_i32_0 = arith.constant 0 : i32
    %c0_i32_1 = arith.constant 0 : i32
    return %c0_i32, %c0_i32_0 : i32, i32
  }
  func.func @transform_2(%arg0: i32) -> (i32, i32) {
    %c0_i32 = arith.constant 0 : i32
    %c0_i32_0 = arith.constant 0 : i32
    %c0_i32_1 = arith.constant 0 : i32
    return %c0_i32, %c0_i32_0 : i32, i32
  }
  func.func @transform_3(%arg0: i32) -> (i32, i32, i32) {
    %c0_i32 = arith.constant 0 : i32
    %c0_i32_0 = arith.constant 0 : i32
    %c0_i32_1 = arith.constant 0 : i32
    return %arg0, %c0_i32, %c0_i32_0 : i32, i32, i32
  }
}

module attributes {stable_mosaic.version = 11 : i64} {
  func.func @_fc_tail_kernel(%arg0: memref<2x256xbf16, #tpu.memory_space<vmem>>, %arg1: memref<256x128xbf16, #tpu.memory_space<vmem>>, %arg2: memref<1x128xf32, #tpu.memory_space<vmem>>, %arg3: memref<128x128xbf16, #tpu.memory_space<vmem>>, %arg4: memref<1x128xf32, #tpu.memory_space<vmem>>, %arg5: memref<128x128xbf16, #tpu.memory_space<vmem>>, %arg6: memref<1x128xf32, #tpu.memory_space<vmem>>, %arg7: memref<2x128xf32, #tpu.memory_space<vmem>>) attributes {dimension_semantics = [], scalar_prefetch = 0 : i64, scratch_operands = 0 : i64, tpu.core_type = #tpu.core_type<tc>} {
    %c0 = arith.constant 0 : index
    %c0_0 = arith.constant 0 : index
    %0 = vector.load %arg0[%c0, %c0_0] : memref<2x256xbf16, #tpu.memory_space<vmem>>, vector<2x256xbf16>
    %c0_1 = arith.constant 0 : index
    %c0_2 = arith.constant 0 : index
    %1 = vector.load %arg1[%c0_1, %c0_2] : memref<256x128xbf16, #tpu.memory_space<vmem>>, vector<256x128xbf16>
    %cst = arith.constant dense<0.000000e+00> : vector<2x128xf32>
    %2 = tpu.matmul %0, %1, %cst {dimension_numbers = #tpu.dot_dimension_numbers<[1], [0], [0], [1], [0, 0, 1, 1], [], []>} : vector<2x256xbf16>, vector<256x128xbf16>, vector<2x128xf32> -> vector<2x128xf32>
    %c0_3 = arith.constant 0 : index
    %c0_4 = arith.constant 0 : index
    %3 = vector.load %arg2[%c0_3, %c0_4] : memref<1x128xf32, #tpu.memory_space<vmem>>, vector<1x128xf32>
    %4 = vector.broadcast %3 : vector<1x128xf32> to vector<2x128xf32>
    %5 = arith.addf %2, %4 : vector<2x128xf32>
    %cst_5 = arith.constant 0.000000e+00 : f32
    %6 = vector.broadcast %cst_5 : f32 to vector<2x128xf32>
    %7 = arith.maximumf %5, %6 : vector<2x128xf32>
    %8 = arith.truncf %7 : vector<2x128xf32> to vector<2x128xbf16>
    %c0_6 = arith.constant 0 : index
    %c0_7 = arith.constant 0 : index
    %9 = vector.load %arg3[%c0_6, %c0_7] : memref<128x128xbf16, #tpu.memory_space<vmem>>, vector<128x128xbf16>
    %cst_8 = arith.constant dense<0.000000e+00> : vector<2x128xf32>
    %10 = tpu.matmul %8, %9, %cst_8 {dimension_numbers = #tpu.dot_dimension_numbers<[1], [0], [0], [1], [0, 0, 1, 1], [], []>} : vector<2x128xbf16>, vector<128x128xbf16>, vector<2x128xf32> -> vector<2x128xf32>
    %c0_9 = arith.constant 0 : index
    %c0_10 = arith.constant 0 : index
    %11 = vector.load %arg4[%c0_9, %c0_10] : memref<1x128xf32, #tpu.memory_space<vmem>>, vector<1x128xf32>
    %12 = vector.broadcast %11 : vector<1x128xf32> to vector<2x128xf32>
    %13 = arith.addf %10, %12 : vector<2x128xf32>
    %cst_11 = arith.constant 0.000000e+00 : f32
    %14 = vector.broadcast %cst_11 : f32 to vector<2x128xf32>
    %15 = arith.maximumf %13, %14 : vector<2x128xf32>
    %16 = arith.truncf %15 : vector<2x128xf32> to vector<2x128xbf16>
    %c0_12 = arith.constant 0 : index
    %c0_13 = arith.constant 0 : index
    %17 = vector.load %arg5[%c0_12, %c0_13] : memref<128x128xbf16, #tpu.memory_space<vmem>>, vector<128x128xbf16>
    %cst_14 = arith.constant dense<0.000000e+00> : vector<2x128xf32>
    %18 = tpu.matmul %16, %17, %cst_14 {dimension_numbers = #tpu.dot_dimension_numbers<[1], [0], [0], [1], [0, 0, 1, 1], [], []>} : vector<2x128xbf16>, vector<128x128xbf16>, vector<2x128xf32> -> vector<2x128xf32>
    %c0_15 = arith.constant 0 : index
    %c0_16 = arith.constant 0 : index
    %19 = vector.load %arg6[%c0_15, %c0_16] : memref<1x128xf32, #tpu.memory_space<vmem>>, vector<1x128xf32>
    %20 = vector.broadcast %19 : vector<1x128xf32> to vector<2x128xf32>
    %21 = arith.addf %18, %20 : vector<2x128xf32>
    %c0_17 = arith.constant 0 : index
    %c0_18 = arith.constant 0 : index
    %22 = vector.load %arg7[%c0_17, %c0_18] : memref<2x128xf32, #tpu.memory_space<vmem>>, vector<2x128xf32>
    tpu.vector_store %arg7[%c0_17, %c0_18], %21 {strides = array<i32>} : memref<2x128xf32, #tpu.memory_space<vmem>>, vector<2x128xf32>,
    return
  }
}

</mosaic_0001>

<llo_original>
// kernel: example_net_forward.3
$region0: #{example_net_forward.3}
  #allocation0 [shape = 'u32[]', space=smem, size = 0x4, offset = 0x4, fixed_abs, tag = 'smem constant byte address 0x4 - core index']
  #allocation1 [shape = 'u32[72,128]{1,0:T(1,128)}', space=vmem, size = 0x9000, scoped, tag = 'internal scratch']
  %s0 = inlined_call_operand.vmem [shape: bf16[2,576,32], index: 0, kind: input, shape index: {}]
  %s1 = inlined_call_operand.vmem [shape: bf16[32,128], index: 1, kind: input, shape index: {}]
  %s2 = inlined_call_operand.vmem [shape: f32[1,128], index: 2, kind: input, shape index: {}]
  %s3 = inlined_call_operand.vmem [shape: bf16[2,144,128], index: 3, kind: output, shape index: {}]
  %s4 = sld [smem:[#allocation0]]
  $region45: #{example_net_forward.3} parent=0
    _
  %s6 = ssub.s32 1, %s4
  %s7 = scalar_select 0, %s6, %s4
  loop: start=0, step=1, limit=4
  $region2: #{example_net_forward.3} parent=0 // loop_pre_header
    _
  $region3: #{example_net_forward.3} parent=0 // loop_header
    %s9 = sphi 0, %s13
    %p10 = scmp.ge.s32.totalorder %s9, 4
    %s19 = sphi 0, %s21
    %s22 = sphi 0, %s19
    %s23 = sphi 0, %s22
    %s39 = sphi 0, %s23
    %s43 = sphi 0, %s43
    %s45 = sphi 0, %s43
    %s46 = sphi 0, %s45
    %s60 = sphi 0, %s46
    %s64 = sphi 0, %s64
    %s66 = sphi 0, %s64
    %s67 = sphi 0, %s66
    %s81 = sphi 0, %s67
    %s87 = sphi 0, %s89
    %s90 = sphi 0, %s87
    %s91 = sphi 0, %s90
    %s107 = sphi 0, %s91
  $region4: #{example_net_forward.3} parent=0 // loop_header_branch
    %12 = sbr.rel (%p10) target = $region8
  $region5: #{example_net_forward.3} parent=0 // loop_body
    %s14 = ssub.s32 %s9, 1
    %s15 = ssub.s32 %s9, 2
    %s16 = sadd.s32 %s9, 1
    %s17 = ssub.s32 %s9, %s16
    %p18 = scmp.eq.s32.totalorder %s17, 0
    %s20 = sadd.s32 %s19, 1
    %s21 = scalar_select %p18, %s19, %s20
    %p24 = pneg %p18
    %p25 = scmp.eq.s32.totalorder %s9, 1
    %p26 = por %p24, %p25
    %p27 = scmp.ne.s32.totalorder %s19, %s22
    %p28 = scmp.eq.s32.totalorder %s9, 0
    %p29 = por %p27, %p28
    %p30 = scmp.ne.s32.totalorder %s19, %s22
    %p31 = scmp.eq.s32.totalorder %s14, 1
    %p32 = por %p30, %p31
    %p33 = scmp.ne.s32.totalorder %s22, %s23
    %p34 = scmp.eq.s32.totalorder %s14, 0
    %p35 = por %p33, %p34
    %p36 = scmp.ne.s32.totalorder %s22, %s23
    %p37 = scmp.eq.s32.totalorder %s15, 1
    %p38 = por %p36, %p37
    %p40 = scmp.ne.s32.totalorder %s23, %s39
    %p41 = scmp.eq.s32.totalorder %s15, 0
    %p42 = por %p40, %p41
    %s44 = sadd.s32 %s43, 1
    %p47 = scmp.eq.s32.totalorder %s9, 1
    %p48 = scmp.ne.s32.totalorder %s43, %s45
    %p49 = scmp.eq.s32.totalorder %s9, 0
    %p50 = por %p48, %p49
    %p51 = scmp.ne.s32.totalorder %s43, %s45
    %p52 = scmp.eq.s32.totalorder %s14, 1
    %p53 = por %p51, %p52
    %p54 = scmp.ne.s32.totalorder %s45, %s46
    %p55 = scmp.eq.s32.totalorder %s14, 0
    %p56 = por %p54, %p55
    %p57 = scmp.ne.s32.totalorder %s45, %s46
    %p58 = scmp.eq.s32.totalorder %s15, 1
    %p59 = por %p57, %p58
    %p61 = scmp.ne.s32.totalorder %s46, %s60
    %p62 = scmp.eq.s32.totalorder %s15, 0
    %p63 = por %p61, %p62
    %s65 = sadd.s32 %s64, 1
    %p68 = scmp.eq.s32.totalorder %s9, 1
    %p69 = scmp.ne.s32.totalorder %s64, %s66
    %p70 = scmp.eq.s32.totalorder %s9, 0
    %p71 = por %p69, %p70
    %p72 = scmp.ne.s32.totalorder %s64, %s66
    %p73 = scmp.eq.s32.totalorder %s14, 1
    %p74 = por %p72, %p73
    %p75 = scmp.ne.s32.totalorder %s66, %s67
    %p76 = scmp.eq.s32.totalorder %s14, 0
    %p77 = por %p75, %p76
    %p78 = scmp.ne.s32.totalorder %s66, %s67
    %p79 = scmp.eq.s32.totalorder %s15, 1
    %p80 = por %p78, %p79
    %p82 = scmp.ne.s32.totalorder %s67, %s81
    %p83 = scmp.eq.s32.totalorder %s15, 0
    %p84 = por %p82, %p83
    %s85 = ssub.s32 %s9, %s16
    %p86 = scmp.eq.s32.totalorder %s85, 0
    %s88 = sadd.s32 %s87, 1
    %s89 = scalar_select %p86, %s87, %s88
    %p92 = pneg %p86
    %p93 = scmp.eq.s32.totalorder %s9, 1
    %p94 = por %p92, %p93
    %p95 = scmp.ne.s32.totalorder %s87, %s90
    %p96 = scmp.eq.s32.totalorder %s9, 0
    %p97 = por %p95, %p96
    %p98 = scmp.ne.s32.totalorder %s87, %s90
    %p99 = scmp.eq.s32.totalorder %s14, 1
    %p100 = por %p98, %p99
    %p101 = scmp.ne.s32.totalorder %s90, %s91
    %p102 = scmp.eq.s32.totalorder %s14, 0
    %p103 = por %p101, %p102
    %p104 = scmp.ne.s32.totalorder %s90, %s91
    %p105 = scmp.eq.s32.totalorder %s15, 1
    %p106 = por %p104, %p105
    %p108 = scmp.ne.s32.totalorder %s91, %s107
    %p109 = scmp.eq.s32.totalorder %s15, 0
    %p110 = por %p108, %p109
    %p111 = scmp.le.s32.totalorder 1, %s9
    %p112 = scmp.lt.s32.totalorder %s9, 3
    %p113 = pnand %p111, %p112
    %p114 = pneg %p113
    // Predicated region
    $region9: #{example_net_forward.3} parent=5 // pred_check
      _
    $region10: #{example_net_forward.3} parent=5 // pred_check_branch
      %116 = sbr.rel (%p113) target = $region12
    $region11: #{example_net_forward.3} parent=5 // pred_region
      %s117 = ssub.s32 %s9, 1
      // Predicated region
      $region13: #{example_net_forward.3} parent=11 // pred_check
        %p118 = pneg %p56
      $region14: #{example_net_forward.3} parent=11 // pred_check_branch
        %120 = sbr.rel (%p118) target = $region16
      $region15: #{example_net_forward.3} parent=11 // pred_region
        _
      $region16: #{example_net_forward.3} parent=11 // pred_fallthru
        _
      // Predicated region
      $region17: #{example_net_forward.3} parent=11 // pred_check
        %p121 = pneg %p77
      $region18: #{example_net_forward.3} parent=11 // pred_check_branch
        %123 = sbr.rel (%p121) target = $region20
      $region19: #{example_net_forward.3} parent=11 // pred_region
        _
      $region20: #{example_net_forward.3} parent=11 // pred_fallthru
        _
    $region12: #{example_net_forward.3} parent=5 // pred_fallthru
      _
    %p124 = scmp.lt.s32.totalorder %s9, 2
    // Predicated region
    $region21: #{example_net_forward.3} parent=5 // pred_check
      %p125 = pneg %p124
    $region22: #{example_net_forward.3} parent=5 // pred_check_branch
      %127 = sbr.rel (%p125) target = $region24
    $region23: #{example_net_forward.3} parent=5 // pred_region
      // Predicated region
      $region25: #{example_net_forward.3} parent=23 // pred_check
        %p128 = pneg %p29
      $region26: #{example_net_forward.3} parent=23 // pred_check_branch
        %130 = sbr.rel (%p128) target = $region28
      $region27: #{example_net_forward.3} parent=23 // pred_region
        %p131 = scmp.lt.s32.totalorder %s9, 1
        %s132 = scalar_select %p131, %s9, 1
        %s133 = smul.addr %s132, 72
        %s134 = smul.addr %s133, 4
        %s135 = scalar_lea.vmem %s0, %s134
      $region28: #{example_net_forward.3} parent=23 // pred_fallthru
        _
    $region24: #{example_net_forward.3} parent=5 // pred_fallthru
      _
    %p136 = scmp.le.s32.totalorder 1, %s9
    %p137 = scmp.lt.s32.totalorder %s9, 3
    %p138 = pnand %p136, %p137
    %p139 = pneg %p138
    // Predicated region
    $region29: #{example_net_forward.3} parent=5 // pred_check
      _
    $region30: #{example_net_forward.3} parent=5 // pred_check_branch
      %141 = sbr.rel (%p138) target = $region32
    $region31: #{example_net_forward.3} parent=5 // pred_region
      %s142 = ssub.s32 %s9, 1
      %p143 = scmp.lt.s32.totalorder %s14, 1
      %s144 = scalar_select %p143, %s14, 1
      %s145 = smul.addr %s144, 72
      %s146 = smul.addr %s145, 4
      %s147 = scalar_lea.vmem %s0, %s146
      %p148 = pneg %p35
      %p149 = pneg %p32
      %p150 = pneg %p56
      %p151 = pneg %p53
      %p152 = pneg %p77
      %p153 = pneg %p74
      %p154 = pneg %p103
      %p155 = pneg %p100
      %p156 = scmp.lt.s32.totalorder %s14, 1
      %s157 = scalar_select %p156, %s14, 1
      %s158 = smul.addr %s157, 18
      %s159 = smul.addr %s158, 4
      %s160 = scalar_lea.vmem %s3, %s159
      %p161 = scmp.lt.s32.totalorder %s14, 1
      %s162 = scalar_select %p161, %s14, 1
      %s163 = smul.addr %s162, 72
      %s164 = smul.addr %s163, 4
      %s165 = scalar_lea.vmem %s0, %s164
      %p166 = scmp.lt.s32.totalorder %s14, 1
      %s167 = scalar_select %p166, %s14, 1
      %s168 = smul.addr %s167, 18
      %s169 = smul.addr %s168, 4
      %s170 = scalar_lea.vmem %s3, %s169
      %v172 = vld [vmem:[%s165] sm:$0xf]
      %v173 = vld [vmem:[%s165 + $0x4] sm:$0xf]
      %v174 = vld [vmem:[%s165 + $0x8] sm:$0xf]
      %v175 = vld [vmem:[%s165 + $0xc] sm:$0xf]
      %v176 = vld [vmem:[%s165 + $0x10] sm:$0xf]
      %v177 = vld [vmem:[%s165 + $0x14] sm:$0xf]
      %v178 = vld [vmem:[%s165 + $0x18] sm:$0xf]
      %v179 = vld [vmem:[%s165 + $0x1c] sm:$0xf]
      %v180 = vld [vmem:[%s165 + $0x20] sm:$0xf]
      %v181 = vld [vmem:[%s165 + $0x24] sm:$0xf]
      %v182 = vld [vmem:[%s165 + $0x28] sm:$0xf]
      %v183 = vld [vmem:[%s165 + $0x2c] sm:$0xf]
      %v184 = vld [vmem:[%s165 + $0x30] sm:$0xf]
      %v185 = vld [vmem:[%s165 + $0x34] sm:$0xf]
      %v186 = vld [vmem:[%s165 + $0x38] sm:$0xf]
      %v187 = vld [vmem:[%s165 + $0x3c] sm:$0xf]
      %v188 = vld [vmem:[%s165 + $0x40] sm:$0xf]
      %v189 = vld [vmem:[%s165 + $0x44] sm:$0xf]
      %v190 = vld [vmem:[%s165 + $0x48] sm:$0xf]
      %v191 = vld [vmem:[%s165 + $0x4c] sm:$0xf]
      %v192 = vld [vmem:[%s165 + $0x50] sm:$0xf]
      %v193 = vld [vmem:[%s165 + $0x54] sm:$0xf]
      %v194 = vld [vmem:[%s165 + $0x58] sm:$0xf]
      %v195 = vld [vmem:[%s165 + $0x5c] sm:$0xf]
      %v196 = vld [vmem:[%s165 + $0x60] sm:$0xf]
      %v197 = vld [vmem:[%s165 + $0x64] sm:$0xf]
      %v198 = vld [vmem:[%s165 + $0x68] sm:$0xf]
      %v199 = vld [vmem:[%s165 + $0x6c] sm:$0xf]
      %v200 = vld [vmem:[%s165 + $0x70] sm:$0xf]
      %v201 = vld [vmem:[%s165 + $0x74] sm:$0xf]
      %v202 = vld [vmem:[%s165 + $0x78] sm:$0xf]
      %v203 = vld [vmem:[%s165 + $0x7c] sm:$0xf]
      %v204 = vld [vmem:[%s165 + $0x80] sm:$0xf]
      %v205 = vld [vmem:[%s165 + $0x84] sm:$0xf]
      %v206 = vld [vmem:[%s165 + $0x88] sm:$0xf]
      %v207 = vld [vmem:[%s165 + $0x8c] sm:$0xf]
      %v208 = vld [vmem:[%s165 + $0x90] sm:$0xf]
      %v209 = vld [vmem:[%s165 + $0x94] sm:$0xf]
      %v210 = vld [vmem:[%s165 + $0x98] sm:$0xf]
      %v211 = vld [vmem:[%s165 + $0x9c] sm:$0xf]
      %v212 = vld [vmem:[%s165 + $0xa0] sm:$0xf]
      %v213 = vld [vmem:[%s165 + $0xa4] sm:$0xf]
      %v214 = vld [vmem:[%s165 + $0xa8] sm:$0xf]
      %v215 = vld [vmem:[%s165 + $0xac] sm:$0xf]
      %v216 = vld [vmem:[%s165 + $0xb0] sm:$0xf]
      %v217 = vld [vmem:[%s165 + $0xb4] sm:$0xf]
      %v218 = vld [vmem:[%s165 + $0xb8] sm:$0xf]
      %v219 = vld [vmem:[%s165 + $0xbc] sm:$0xf]
      %v220 = vld [vmem:[%s165 + $0xc0] sm:$0xf]
      %v221 = vld [vmem:[%s165 + $0xc4] sm:$0xf]
      %v222 = vld [vmem:[%s165 + $0xc8] sm:$0xf]
      %v223 = vld [vmem:[%s165 + $0xcc] sm:$0xf]
      %v224 = vld [vmem:[%s165 + $0xd0] sm:$0xf]
      %v225 = vld [vmem:[%s165 + $0xd4] sm:$0xf]
      %v226 = vld [vmem:[%s165 + $0xd8] sm:$0xf]
      %v227 = vld [vmem:[%s165 + $0xdc] sm:$0xf]
      %v228 = vld [vmem:[%s165 + $0xe0] sm:$0xf]
      %v229 = vld [vmem:[%s165 + $0xe4] sm:$0xf]
      %v230 = vld [vmem:[%s165 + $0xe8] sm:$0xf]
      %v231 = vld [vmem:[%s165 + $0xec] sm:$0xf]
      %v232 = vld [vmem:[%s165 + $0xf0] sm:$0xf]
      %v233 = vld [vmem:[%s165 + $0xf4] sm:$0xf]
      %v234 = vld [vmem:[%s165 + $0xf8] sm:$0xf]
      %v235 = vld [vmem:[%s165 + $0xfc] sm:$0xf]
      %v236 = vld [vmem:[%s165 + $0x100] sm:$0xf]
      %v237 = vld [vmem:[%s165 + $0x104] sm:$0xf]
      %v238 = vld [vmem:[%s165 + $0x108] sm:$0xf]
      %v239 = vld [vmem:[%s165 + $0x10c] sm:$0xf]
      %v240 = vld [vmem:[%s165 + $0x110] sm:$0xf]
      %v241 = vld [vmem:[%s165 + $0x114] sm:$0xf]
      %v242 = vld [vmem:[%s165 + $0x118] sm:$0xf]
      %v243 = vld [vmem:[%s165 + $0x11c] sm:$0xf]
      %v244 = vld [vmem:[%s1] sm:$0xf]
      %v245 = vld [vmem:[%s1 + $0x4] sm:$0xf]
      %v246 = vld [vmem:[%s1 + $0x8] sm:$0xf]
      %v247 = vld [vmem:[%s1 + $0xc] sm:$0xf]
      %v248 = vld [vmem:[%s2] sm:$0x1]
      %v250 = vperm.slane %v248, 0
      %v324 = vunpack.c.l.b16 %v172
      %v325 = vunpack.c.l.b16 %v173
      %v326 = vunpack.c.l.b16 %v174
      %v327 = vunpack.c.l.b16 %v175
      %v328 = vunpack.c.l.b16 %v176
      %v329 = vunpack.c.l.b16 %v177
      %v330 = vunpack.c.l.b16 %v178
      %v331 = vunpack.c.l.b16 %v179
      %v332 = vunpack.c.l.b16 %v180
      %v333 = vunpack.c.l.b16 %v181
      %v334 = vunpack.c.l.b16 %v182
      %v335 = vunpack.c.l.b16 %v183
      %v336 = vunpack.c.l.b16 %v184
      %v337 = vunpack.c.l.b16 %v185
      %v338 = vunpack.c.l.b16 %v186
      %v339 = vunpack.c.l.b16 %v187
      %v340 = vunpack.c.l.b16 %v188
      %v341 = vunpack.c.l.b16 %v189
      %v342 = vunpack.c.l.b16 %v190
      %v343 = vunpack.c.l.b16 %v191
      %v344 = vunpack.c.l.b16 %v192
      %v345 = vunpack.c.l.b16 %v193
      %v346 = vunpack.c.l.b16 %v194
      %v347 = vunpack.c.l.b16 %v195
      %v348 = vunpack.c.l.b16 %v196
      %v349 = vunpack.c.l.b16 %v197
      %v350 = vunpack.c.l.b16 %v198
      %v351 = vunpack.c.l.b16 %v199
      %v352 = vunpack.c.l.b16 %v200
      %v353 = vunpack.c.l.b16 %v201
      %v354 = vunpack.c.l.b16 %v202
      %v355 = vunpack.c.l.b16 %v203
      %v356 = vunpack.c.l.b16 %v204
      %v357 = vunpack.c.l.b16 %v205
      %v358 = vunpack.c.l.b16 %v206
      %v359 = vunpack.c.l.b16 %v207
      %v360 = vunpack.c.l.b16 %v208
      %v361 = vunpack.c.l.b16 %v209
      %v362 = vunpack.c.l.b16 %v210
      %v363 = vunpack.c.l.b16 %v211
      %v364 = vunpack.c.l.b16 %v212
      %v365 = vunpack.c.l.b16 %v213
      %v366 = vunpack.c.l.b16 %v214
      %v367 = vunpack.c.l.b16 %v215
      %v368 = vunpack.c.l.b16 %v216
      %v369 = vunpack.c.l.b16 %v217
      %v370 = vunpack.c.l.b16 %v218
      %v371 = vunpack.c.l.b16 %v219
      %v372 = vunpack.c.l.b16 %v220
      %v373 = vunpack.c.l.b16 %v221
      %v374 = vunpack.c.l.b16 %v222
      %v375 = vunpack.c.l.b16 %v223
      %v376 = vunpack.c.l.b16 %v224
      %v377 = vunpack.c.l.b16 %v225
      %v378 = vunpack.c.l.b16 %v226
      %v379 = vunpack.c.l.b16 %v227
      %v380 = vunpack.c.l.b16 %v228
      %v381 = vunpack.c.l.b16 %v229
      %v382 = vunpack.c.l.b16 %v230
      %v383 = vunpack.c.l.b16 %v231
      %v384 = vunpack.c.l.b16 %v232
      %v385 = vunpack.c.l.b16 %v233
      %v386 = vunpack.c.l.b16 %v234
      %v387 = vunpack.c.l.b16 %v235
      %v388 = vunpack.c.l.b16 %v236
      %v389 = vunpack.c.l.b16 %v237
      %v390 = vunpack.c.l.b16 %v238
      %v391 = vunpack.c.l.b16 %v239
      %v392 = vunpack.c.l.b16 %v240
      %v393 = vunpack.c.l.b16 %v241
      %v394 = vunpack.c.l.b16 %v242
      %v395 = vunpack.c.l.b16 %v243
      %v396 = vpack.c.b16 %v325, %v324
      %v397 = vpack.c.b16 %v327, %v326
      %v398 = vpack.c.b16 %v329, %v328
      %v399 = vpack.c.b16 %v331, %v330
      %v400 = vpack.c.b16 %v333, %v332
      %v401 = vpack.c.b16 %v335, %v334
      %v402 = vpack.c.b16 %v337, %v336
      %v403 = vpack.c.b16 %v339, %v338
      %v404 = vpack.c.b16 %v341, %v340
      %v405 = vpack.c.b16 %v343, %v342
      %v406 = vpack.c.b16 %v345, %v344
      %v407 = vpack.c.b16 %v347, %v346
      %v408 = vpack.c.b16 %v349, %v348
      %v409 = vpack.c.b16 %v351, %v350
      %v410 = vpack.c.b16 %v353, %v352
      %v411 = vpack.c.b16 %v355, %v354
      %v412 = vpack.c.b16 %v357, %v356
      %v413 = vpack.c.b16 %v359, %v358
      %v414 = vpack.c.b16 %v361, %v360
      %v415 = vpack.c.b16 %v363, %v362
      %v416 = vpack.c.b16 %v365, %v364
      %v417 = vpack.c.b16 %v367, %v366
      %v418 = vpack.c.b16 %v369, %v368
      %v419 = vpack.c.b16 %v371, %v370
      %v420 = vpack.c.b16 %v373, %v372
      %v421 = vpack.c.b16 %v375, %v374
      %v422 = vpack.c.b16 %v377, %v376
      %v423 = vpack.c.b16 %v379, %v378
      %v424 = vpack.c.b16 %v381, %v380
      %v425 = vpack.c.b16 %v383, %v382
      %v426 = vpack.c.b16 %v385, %v384
      %v427 = vpack.c.b16 %v387, %v386
      %v428 = vpack.c.b16 %v389, %v388
      %v429 = vpack.c.b16 %v391, %v390
      %v430 = vpack.c.b16 %v393, %v392
      %v431 = vpack.c.b16 %v395, %v394
      %v436 = vunpack.c.l.b16 %v244
      %v437 = vunpack.c.l.b16 %v245
      %v438 = vunpack.c.l.b16 %v246
      %v439 = vunpack.c.l.b16 %v247
      %v440 = vpack.c.b16 %v437, %v436
      %v441 = vpack.c.b16 %v439, %v438
      %vm444 = vcmask 261120
      %v446 = vsel %vm444, %v396, 0
      %v449 = vsel %vm444, %v397, 0
      %v452 = vsel %vm444, %v398, 0
      %v455 = vsel %vm444, %v399, 0
      %v458 = vsel %vm444, %v400, 0
      %v461 = vsel %vm444, %v401, 0
      %v464 = vsel %vm444, %v402, 0
      %v467 = vsel %vm444, %v403, 0
      %v470 = vsel %vm444, %v404, 0
      %v473 = vsel %vm444, %v405, 0
      %v476 = vsel %vm444, %v406, 0
      %v479 = vsel %vm444, %v407, 0
      %v482 = vsel %vm444, %v408, 0
      %v485 = vsel %vm444, %v409, 0
      %v488 = vsel %vm444, %v410, 0
      %v491 = vsel %vm444, %v411, 0
      %v494 = vsel %vm444, %v412, 0
      %v497 = vsel %vm444, %v413, 0
      %v500 = vsel %vm444, %v414, 0
      %v503 = vsel %vm444, %v415, 0
      %v506 = vsel %vm444, %v416, 0
      %v509 = vsel %vm444, %v417, 0
      %v512 = vsel %vm444, %v418, 0
      %v515 = vsel %vm444, %v419, 0
      %v518 = vsel %vm444, %v420, 0
      %v521 = vsel %vm444, %v421, 0
      %v524 = vsel %vm444, %v422, 0
      %v527 = vsel %vm444, %v423, 0
      %v530 = vsel %vm444, %v424, 0
      %v533 = vsel %vm444, %v425, 0
      %v536 = vsel %vm444, %v426, 0
      %v539 = vsel %vm444, %v427, 0
      %v542 = vsel %vm444, %v428, 0
      %v545 = vsel %vm444, %v429, 0
      %v548 = vsel %vm444, %v430, 0
      %v551 = vsel %vm444, %v431, 0
      %553 = vmatpush.bf16.msra.mxu0 0
      %554 = vmatpush.bf16.msra.mxu0 0
      %555 = vmatpush.bf16.msra.mxu0 0
      %556 = vmatpush.bf16.msra.mxu0 0
      %557 = vmatpush.bf16.msra.mxu0 0
      %558 = vmatpush.bf16.msra.mxu0 0
      %559 = vmatpush.bf16.msra.mxu0 %v441
      %560 = vmatpush.bf16.msra.mxu0 %v440
      %561 = vmatmul.bf16.gmra.mxu0 %v446
      %v562 = vpop.f32.mrf.mxu0
      %v563 = vadd.f32 %v250, %v562
      %v564 = vpop.f32.mrf.mxu0
      %v565 = vadd.f32 %v250, %v564
      %566 = vmatmul.bf16.gmra.mxu0 %v449
      %v567 = vpop.f32.mrf.mxu0
      %v568 = vadd.f32 %v250, %v567
      %v569 = vpop.f32.mrf.mxu0
      %v570 = vadd.f32 %v250, %v569
      %571 = vmatmul.bf16.gmra.mxu0 %v452
      %v572 = vpop.f32.mrf.mxu0
      %v573 = vadd.f32 %v250, %v572
      %v574 = vpop.f32.mrf.mxu0
      %v575 = vadd.f32 %v250, %v574
      %576 = vmatmul.bf16.gmra.mxu0 %v455
      %v577 = vpop.f32.mrf.mxu0
      %v578 = vadd.f32 %v250, %v577
      %v579 = vpop.f32.mrf.mxu0
      %v580 = vadd.f32 %v250, %v579
      %581 = vmatmul.bf16.gmra.mxu0 %v458
      %v582 = vpop.f32.mrf.mxu0
      %v583 = vadd.f32 %v250, %v582
      %v584 = vpop.f32.mrf.mxu0
      %v585 = vadd.f32 %v250, %v584
      %586 = vmatmul.bf16.gmra.mxu0 %v461
      %v587 = vpop.f32.mrf.mxu0
      %v588 = vadd.f32 %v250, %v587
      %v589 = vpop.f32.mrf.mxu0
      %v590 = vadd.f32 %v250, %v589
      %591 = vmatmul.bf16.gmra.mxu0 %v464
      %v592 = vpop.f32.mrf.mxu0
      %v593 = vadd.f32 %v250, %v592
      %v594 = vpop.f32.mrf.mxu0
      %v595 = vadd.f32 %v250, %v594
      %596 = vmatmul.bf16.gmra.mxu0 %v467
      %v597 = vpop.f32.mrf.mxu0
      %v598 = vadd.f32 %v250, %v597
      %v599 = vpop.f32.mrf.mxu0
      %v600 = vadd.f32 %v250, %v599
      %601 = vmatmul.bf16.gmra.mxu0 %v470
      %v602 = vpop.f32.mrf.mxu0
      %v603 = vadd.f32 %v250, %v602
      %v604 = vpop.f32.mrf.mxu0
      %v605 = vadd.f32 %v250, %v604
      %606 = vmatmul.bf16.gmra.mxu0 %v473
      %v607 = vpop.f32.mrf.mxu0
      %v608 = vadd.f32 %v250, %v607
      %v609 = vpop.f32.mrf.mxu0
      %v610 = vadd.f32 %v250, %v609
      %611 = vmatmul.bf16.gmra.mxu0 %v476
      %v612 = vpop.f32.mrf.mxu0
      %v613 = vadd.f32 %v250, %v612
      %v614 = vpop.f32.mrf.mxu0
      %v615 = vadd.f32 %v250, %v614
      %616 = vmatmul.bf16.gmra.mxu0 %v479
      %v617 = vpop.f32.mrf.mxu0
      %v618 = vadd.f32 %v250, %v617
      %v619 = vpop.f32.mrf.mxu0
      %v620 = vadd.f32 %v250, %v619
      %621 = vmatmul.bf16.gmra.mxu0 %v482
      %v622 = vpop.f32.mrf.mxu0
      %v623 = vadd.f32 %v250, %v622
      %v624 = vpop.f32.mrf.mxu0
      %v625 = vadd.f32 %v250, %v624
      %626 = vmatmul.bf16.gmra.mxu0 %v485
      %v627 = vpop.f32.mrf.mxu0
      %v628 = vadd.f32 %v250, %v627
      %v629 = vpop.f32.mrf.mxu0
      %v630 = vadd.f32 %v250, %v629
      %631 = vmatmul.bf16.gmra.mxu0 %v488
      %v632 = vpop.f32.mrf.mxu0
      %v633 = vadd.f32 %v250, %v632
      %v634 = vpop.f32.mrf.mxu0
      %v635 = vadd.f32 %v250, %v634
      %636 = vmatmul.bf16.gmra.mxu0 %v491
      %v637 = vpop.f32.mrf.mxu0
      %v638 = vadd.f32 %v250, %v637
      %v639 = vpop.f32.mrf.mxu0
      %v640 = vadd.f32 %v250, %v639
      %641 = vmatmul.bf16.gmra.mxu0 %v494
      %v642 = vpop.f32.mrf.mxu0
      %v643 = vadd.f32 %v250, %v642
      %v644 = vpop.f32.mrf.mxu0
      %v645 = vadd.f32 %v250, %v644
      %646 = vmatmul.bf16.gmra.mxu0 %v497
      %v647 = vpop.f32.mrf.mxu0
      %v648 = vadd.f32 %v250, %v647
      %v649 = vpop.f32.mrf.mxu0
      %v650 = vadd.f32 %v250, %v649
      %651 = vmatmul.bf16.gmra.mxu0 %v500
      %v652 = vpop.f32.mrf.mxu0
      %v653 = vadd.f32 %v250, %v652
      %v654 = vpop.f32.mrf.mxu0
      %v655 = vadd.f32 %v250, %v654
      %656 = vmatmul.bf16.gmra.mxu0 %v503
      %v657 = vpop.f32.mrf.mxu0
      %v658 = vadd.f32 %v250, %v657
      %v659 = vpop.f32.mrf.mxu0
      %v660 = vadd.f32 %v250, %v659
      %661 = vmatmul.bf16.gmra.mxu0 %v506
      %v662 = vpop.f32.mrf.mxu0
      %v663 = vadd.f32 %v250, %v662
      %v664 = vpop.f32.mrf.mxu0
      %v665 = vadd.f32 %v250, %v664
      %666 = vmatmul.bf16.gmra.mxu0 %v509
      %v667 = vpop.f32.mrf.mxu0
      %v668 = vadd.f32 %v250, %v667
      %v669 = vpop.f32.mrf.mxu0
      %v670 = vadd.f32 %v250, %v669
      %671 = vmatmul.bf16.gmra.mxu0 %v512
      %v672 = vpop.f32.mrf.mxu0
      %v673 = vadd.f32 %v250, %v672
      %v674 = vpop.f32.mrf.mxu0
      %v675 = vadd.f32 %v250, %v674
      %676 = vmatmul.bf16.gmra.mxu0 %v515
      %v677 = vpop.f32.mrf.mxu0
      %v678 = vadd.f32 %v250, %v677
      %v679 = vpop.f32.mrf.mxu0
      %v680 = vadd.f32 %v250, %v679
      %681 = vmatmul.bf16.gmra.mxu0 %v518
      %v682 = vpop.f32.mrf.mxu0
      %v683 = vadd.f32 %v250, %v682
      %v684 = vpop.f32.mrf.mxu0
      %v685 = vadd.f32 %v250, %v684
      %686 = vmatmul.bf16.gmra.mxu0 %v521
      %v687 = vpop.f32.mrf.mxu0
      %v688 = vadd.f32 %v250, %v687
      %v689 = vpop.f32.mrf.mxu0
      %v690 = vadd.f32 %v250, %v689
      %691 = vmatmul.bf16.gmra.mxu0 %v524
      %v692 = vpop.f32.mrf.mxu0
      %v693 = vadd.f32 %v250, %v692
      %v694 = vpop.f32.mrf.mxu0
      %v695 = vadd.f32 %v250, %v694
      %696 = vmatmul.bf16.gmra.mxu0 %v527
      %v697 = vpop.f32.mrf.mxu0
      %v698 = vadd.f32 %v250, %v697
      %v699 = vpop.f32.mrf.mxu0
      %v700 = vadd.f32 %v250, %v699
      %701 = vmatmul.bf16.gmra.mxu0 %v530
      %v702 = vpop.f32.mrf.mxu0
      %v703 = vadd.f32 %v250, %v702
      %v704 = vpop.f32.mrf.mxu0
      %v705 = vadd.f32 %v250, %v704
      %706 = vmatmul.bf16.gmra.mxu0 %v533
      %v707 = vpop.f32.mrf.mxu0
      %v708 = vadd.f32 %v250, %v707
      %v709 = vpop.f32.mrf.mxu0
      %v710 = vadd.f32 %v250, %v709
      %711 = vmatmul.bf16.gmra.mxu0 %v536
      %v712 = vpop.f32.mrf.mxu0
      %v713 = vadd.f32 %v250, %v712
      %v714 = vpop.f32.mrf.mxu0
      %v715 = vadd.f32 %v250, %v714
      %716 = vmatmul.bf16.gmra.mxu0 %v539
      %v717 = vpop.f32.mrf.mxu0
      %v718 = vadd.f32 %v250, %v717
      %v719 = vpop.f32.mrf.mxu0
      %v720 = vadd.f32 %v250, %v719
      %721 = vmatmul.bf16.gmra.mxu0 %v542
      %v722 = vpop.f32.mrf.mxu0
      %v723 = vadd.f32 %v250, %v722
      %v724 = vpop.f32.mrf.mxu0
      %v725 = vadd.f32 %v250, %v724
      %726 = vmatmul.bf16.gmra.mxu0 %v545
      %v727 = vpop.f32.mrf.mxu0
      %v728 = vadd.f32 %v250, %v727
      %v729 = vpop.f32.mrf.mxu0
      %v730 = vadd.f32 %v250, %v729
      %731 = vmatmul.bf16.gmra.mxu0 %v548
      %v732 = vpop.f32.mrf.mxu0
      %v733 = vadd.f32 %v250, %v732
      %v734 = vpop.f32.mrf.mxu0
      %v735 = vadd.f32 %v250, %v734
      %736 = vmatmul.bf16.gmra.mxu0 %v551
      %v737 = vpop.f32.mrf.mxu0
      %v738 = vadd.f32 %v250, %v737
      %v739 = vpop.f32.mrf.mxu0
      %v740 = vadd.f32 %v250, %v739
      %741 = vdwg.mxu0
      %v742 = vmax.f32 %v563, 0.0
      %v743 = vmax.f32 %v565, 0.0
      %v744 = vmax.f32 %v568, 0.0
      %v745 = vmax.f32 %v570, 0.0
      %v746 = vmax.f32 %v573, 0.0
      %v747 = vmax.f32 %v575, 0.0
      %v748 = vmax.f32 %v578, 0.0
      %v749 = vmax.f32 %v580, 0.0
      %v750 = vmax.f32 %v583, 0.0
      %v751 = vmax.f32 %v585, 0.0
      %v752 = vmax.f32 %v588, 0.0
      %v753 = vmax.f32 %v590, 0.0
      %v754 = vmax.f32 %v593, 0.0
      %v755 = vmax.f32 %v595, 0.0
      %v756 = vmax.f32 %v598, 0.0
      %v757 = vmax.f32 %v600, 0.0
      %v758 = vmax.f32 %v603, 0.0
      %v759 = vmax.f32 %v605, 0.0
      %v760 = vmax.f32 %v608, 0.0
      %v761 = vmax.f32 %v610, 0.0
      %v762 = vmax.f32 %v613, 0.0
      %v763 = vmax.f32 %v615, 0.0
      %v764 = vmax.f32 %v618, 0.0
      %v765 = vmax.f32 %v620, 0.0
      %v766 = vmax.f32 %v623, 0.0
      %v767 = vmax.f32 %v625, 0.0
      %v768 = vmax.f32 %v628, 0.0
      %v769 = vmax.f32 %v630, 0.0
      %v770 = vmax.f32 %v633, 0.0
      %v771 = vmax.f32 %v635, 0.0
      %v772 = vmax.f32 %v638, 0.0
      %v773 = vmax.f32 %v640, 0.0
      %v774 = vmax.f32 %v643, 0.0
      %v775 = vmax.f32 %v645, 0.0
      %v776 = vmax.f32 %v648, 0.0
      %v777 = vmax.f32 %v650, 0.0
      %v778 = vmax.f32 %v653, 0.0
      %v779 = vmax.f32 %v655, 0.0
      %v780 = vmax.f32 %v658, 0.0
      %v781 = vmax.f32 %v660, 0.0
      %v782 = vmax.f32 %v663, 0.0
      %v783 = vmax.f32 %v665, 0.0
      %v784 = vmax.f32 %v668, 0.0
      %v785 = vmax.f32 %v670, 0.0
      %v786 = vmax.f32 %v673, 0.0
      %v787 = vmax.f32 %v675, 0.0
      %v788 = vmax.f32 %v678, 0.0
      %v789 = vmax.f32 %v680, 0.0
      %v790 = vmax.f32 %v683, 0.0
      %v791 = vmax.f32 %v685, 0.0
      %v792 = vmax.f32 %v688, 0.0
      %v793 = vmax.f32 %v690, 0.0
      %v794 = vmax.f32 %v693, 0.0
      %v795 = vmax.f32 %v695, 0.0
      %v796 = vmax.f32 %v698, 0.0
      %v797 = vmax.f32 %v700, 0.0
      %v798 = vmax.f32 %v703, 0.0
      %v799 = vmax.f32 %v705, 0.0
      %v800 = vmax.f32 %v708, 0.0
      %v801 = vmax.f32 %v710, 0.0
      %v802 = vmax.f32 %v713, 0.0
      %v803 = vmax.f32 %v715, 0.0
      %v804 = vmax.f32 %v718, 0.0
      %v805 = vmax.f32 %v720, 0.0
      %v806 = vmax.f32 %v723, 0.0
      %v807 = vmax.f32 %v725, 0.0
      %v808 = vmax.f32 %v728, 0.0
      %v809 = vmax.f32 %v730, 0.0
      %v810 = vmax.f32 %v733, 0.0
      %v811 = vmax.f32 %v735, 0.0
      %v812 = vmax.f32 %v738, 0.0
      %v813 = vmax.f32 %v740, 0.0
      %v814 = vmax.f32 %v742, %v760
      %v815 = vmax.f32 %v743, %v761
      %v816 = vmax.f32 %v744, %v762
      %v817 = vmax.f32 %v745, %v763
      %v818 = vmax.f32 %v746, %v764
      %v819 = vmax.f32 %v747, %v765
      %v820 = vmax.f32 %v748, %v766
      %v821 = vmax.f32 %v749, %v767
      %v822 = vmax.f32 %v750, %v768
      %v823 = vmax.f32 %v751, %v769
      %v824 = vmax.f32 %v752, %v770
      %v825 = vmax.f32 %v753, %v771
      %v826 = vmax.f32 %v754, %v772
      %v827 = vmax.f32 %v755, %v773
      %v828 = vmax.f32 %v756, %v774
      %v829 = vmax.f32 %v757, %v775
      %v830 = vmax.f32 %v758, %v776
      %v831 = vmax.f32 %v759, %v777
      %v832 = vmax.f32 %v778, %v796
      %v833 = vmax.f32 %v779, %v797
      %v834 = vmax.f32 %v780, %v798
      %v835 = vmax.f32 %v781, %v799
      %v836 = vmax.f32 %v782, %v800
      %v837 = vmax.f32 %v783, %v801
      %v838 = vmax.f32 %v784, %v802
      %v839 = vmax.f32 %v785, %v803
      %v840 = vmax.f32 %v786, %v804
      %v841 = vmax.f32 %v787, %v805
      %v842 = vmax.f32 %v788, %v806
      %v843 = vmax.f32 %v789, %v807
      %v844 = vmax.f32 %v790, %v808
      %v845 = vmax.f32 %v791, %v809
      %v846 = vmax.f32 %v792, %v810
      %v847 = vmax.f32 %v793, %v811
      %v848 = vmax.f32 %v794, %v812
      %v849 = vmax.f32 %v795, %v813
      %v850 = vmax.f32 %v814, %v832
      %v851 = vmax.f32 %v815, %v833
      %v852 = vmax.f32 %v816, %v834
      %v853 = vmax.f32 %v817, %v835
      %v854 = vmax.f32 %v818, %v836
      %v855 = vmax.f32 %v819, %v837
      %v856 = vmax.f32 %v820, %v838
      %v857 = vmax.f32 %v821, %v839
      %v858 = vmax.f32 %v822, %v840
      %v859 = vmax.f32 %v823, %v841
      %v860 = vmax.f32 %v824, %v842
      %v861 = vmax.f32 %v825, %v843
      %v862 = vmax.f32 %v826, %v844
      %v863 = vmax.f32 %v827, %v845
      %v864 = vmax.f32 %v828, %v846
      %v865 = vmax.f32 %v829, %v847
      %v866 = vmax.f32 %v830, %v848
      %v867 = vmax.f32 %v831, %v849
      %v868 = vpack.c.bf16 %v850, %v850
      %v869 = vpack.c.bf16 %v851, %v851
      %v870 = vpack.c.bf16 %v852, %v852
      %v871 = vpack.c.bf16 %v853, %v853
      %v872 = vpack.c.bf16 %v854, %v854
      %v873 = vpack.c.bf16 %v855, %v855
      %v874 = vpack.c.bf16 %v856, %v856
      %v875 = vpack.c.bf16 %v857, %v857
      %v876 = vpack.c.bf16 %v858, %v858
      %v877 = vpack.c.bf16 %v859, %v859
      %v878 = vpack.c.bf16 %v860, %v860
      %v879 = vpack.c.bf16 %v861, %v861
      %v880 = vpack.c.bf16 %v862, %v862
      %v881 = vpack.c.bf16 %v863, %v863
      %v882 = vpack.c.bf16 %v864, %v864
      %v883 = vpack.c.bf16 %v865, %v865
      %v884 = vpack.c.bf16 %v866, %v866
      %v885 = vpack.c.bf16 %v867, %v867
      %886 = vst [vmem:[%s170] sm:$0xf] %v868
      %887 = vst [vmem:[%s170 + $0x4] sm:$0xf] %v869
      %888 = vst [vmem:[%s170 + $0x8] sm:$0xf] %v870
      %889 = vst [vmem:[%s170 + $0xc] sm:$0xf] %v871
      %890 = vst [vmem:[%s170 + $0x10] sm:$0xf] %v872
      %891 = vst [vmem:[%s170 + $0x14] sm:$0xf] %v873
      %892 = vst [vmem:[%s170 + $0x18] sm:$0xf] %v874
      %893 = vst [vmem:[%s170 + $0x1c] sm:$0xf] %v875
      %894 = vst [vmem:[%s170 + $0x20] sm:$0xf] %v876
      %895 = vst [vmem:[%s170 + $0x24] sm:$0xf] %v877
      %896 = vst [vmem:[%s170 + $0x28] sm:$0xf] %v878
      %897 = vst [vmem:[%s170 + $0x2c] sm:$0xf] %v879
      %898 = vst [vmem:[%s170 + $0x30] sm:$0xf] %v880
      %899 = vst [vmem:[%s170 + $0x34] sm:$0xf] %v881
      %900 = vst [vmem:[%s170 + $0x38] sm:$0xf] %v882
      %901 = vst [vmem:[%s170 + $0x3c] sm:$0xf] %v883
      %902 = vst [vmem:[%s170 + $0x40] sm:$0xf] %v884
      %903 = vst [vmem:[%s170 + $0x44] sm:$0xf] %v885
      %p904 = scmp.lt.s32.totalorder %s14, 1
      %s905 = scalar_select %p904, %s14, 1
      %s906 = smul.addr %s905, 18
      %s907 = smul.addr %s906, 4
      %s908 = scalar_lea.vmem %s3, %s907
      // Predicated region
      $region33: #{example_net_forward.3} parent=31 // pred_check
        %p909 = pneg %p100
      $region34: #{example_net_forward.3} parent=31 // pred_check_branch
        %911 = sbr.rel (%p909) target = $region36
      $region35: #{example_net_forward.3} parent=31 // pred_region
        _
      $region36: #{example_net_forward.3} parent=31 // pred_fallthru
        _
    $region32: #{example_net_forward.3} parent=5 // pred_fallthru
      _
    %p912 = scmp.le.s32.totalorder 2, %s9
    // Predicated region
    $region37: #{example_net_forward.3} parent=5 // pred_check
      %p913 = pneg %p912
    $region38: #{example_net_forward.3} parent=5 // pred_check_branch
      %915 = sbr.rel (%p913) target = $region40
    $region39: #{example_net_forward.3} parent=5 // pred_region
      %s916 = ssub.s32 %s9, 2
      // Predicated region
      $region41: #{example_net_forward.3} parent=39 // pred_check
        %p917 = pneg %p106
      $region42: #{example_net_forward.3} parent=39 // pred_check_branch
        %919 = sbr.rel (%p917) target = $region44
      $region43: #{example_net_forward.3} parent=39 // pred_region
        %p920 = scmp.lt.s32.totalorder %s15, 1
        %s921 = scalar_select %p920, %s15, 1
        %s922 = smul.addr %s921, 18
        %s923 = smul.addr %s922, 4
        %s924 = scalar_lea.vmem %s3, %s923
      $region44: #{example_net_forward.3} parent=39 // pred_fallthru
        _
    $region40: #{example_net_forward.3} parent=5 // pred_fallthru
      _
  $region6: #{example_net_forward.3} parent=0 // loop_footer
    %s13 = sadd.s32 1, %s9
  $region7: #{example_net_forward.3} parent=0 // loop_footer_branch
    %8 = sbr.rel target = $region3
  $region8: #{example_net_forward.3} parent=0 // loop_exit
    _

// kernel: example_net_forward.4
$region0: #{example_net_forward.4}
  #allocation0 [shape = 'u32[]', space=smem, size = 0x4, offset = 0x4, fixed_abs, tag = 'smem constant byte address 0x4 - core index']
  #allocation1 [shape = 'u32[72,128]{1,0:T(1,128)}', space=vmem, size = 0x9000, scoped, tag = 'internal scratch']
  %s0 = inlined_call_operand.vmem [shape: bf16[2,64,160], index: 0, kind: input, shape index: {}]
  %s1 = inlined_call_operand.vmem [shape: bf16[160,128], index: 1, kind: input, shape index: {}]
  %s2 = inlined_call_operand.vmem [shape: f32[1,128], index: 2, kind: input, shape index: {}]
  %s3 = inlined_call_operand.vmem [shape: bf16[2,16,128], index: 3, kind: output, shape index: {}]
  %s4 = sld [smem:[#allocation0]]
  $region45: #{example_net_forward.4} parent=0
    _
  %s6 = ssub.s32 1, %s4
  %s7 = scalar_select 0, %s6, %s4
  loop: start=0, step=1, limit=4
  $region2: #{example_net_forward.4} parent=0 // loop_pre_header
    _
  $region3: #{example_net_forward.4} parent=0 // loop_header
    %s9 = sphi 0, %s13
    %p10 = scmp.ge.s32.totalorder %s9, 4
    %s19 = sphi 0, %s21
    %s22 = sphi 0, %s19
    %s23 = sphi 0, %s22
    %s39 = sphi 0, %s23
    %s43 = sphi 0, %s43
    %s45 = sphi 0, %s43
    %s46 = sphi 0, %s45
    %s60 = sphi 0, %s46
    %s64 = sphi 0, %s64
    %s66 = sphi 0, %s64
    %s67 = sphi 0, %s66
    %s81 = sphi 0, %s67
    %s87 = sphi 0, %s89
    %s90 = sphi 0, %s87
    %s91 = sphi 0, %s90
    %s107 = sphi 0, %s91
  $region4: #{example_net_forward.4} parent=0 // loop_header_branch
    %12 = sbr.rel (%p10) target = $region8
  $region5: #{example_net_forward.4} parent=0 // loop_body
    %s14 = ssub.s32 %s9, 1
    %s15 = ssub.s32 %s9, 2
    %s16 = sadd.s32 %s9, 1
    %s17 = ssub.s32 %s9, %s16
    %p18 = scmp.eq.s32.totalorder %s17, 0
    %s20 = sadd.s32 %s19, 1
    %s21 = scalar_select %p18, %s19, %s20
    %p24 = pneg %p18
    %p25 = scmp.eq.s32.totalorder %s9, 1
    %p26 = por %p24, %p25
    %p27 = scmp.ne.s32.totalorder %s19, %s22
    %p28 = scmp.eq.s32.totalorder %s9, 0
    %p29 = por %p27, %p28
    %p30 = scmp.ne.s32.totalorder %s19, %s22
    %p31 = scmp.eq.s32.totalorder %s14, 1
    %p32 = por %p30, %p31
    %p33 = scmp.ne.s32.totalorder %s22, %s23
    %p34 = scmp.eq.s32.totalorder %s14, 0
    %p35 = por %p33, %p34
    %p36 = scmp.ne.s32.totalorder %s22, %s23
    %p37 = scmp.eq.s32.totalorder %s15, 1
    %p38 = por %p36, %p37
    %p40 = scmp.ne.s32.totalorder %s23, %s39
    %p41 = scmp.eq.s32.totalorder %s15, 0
    %p42 = por %p40, %p41
    %s44 = sadd.s32 %s43, 1
    %p47 = scmp.eq.s32.totalorder %s9, 1
    %p48 = scmp.ne.s32.totalorder %s43, %s45
    %p49 = scmp.eq.s32.totalorder %s9, 0
    %p50 = por %p48, %p49
    %p51 = scmp.ne.s32.totalorder %s43, %s45
    %p52 = scmp.eq.s32.totalorder %s14, 1
    %p53 = por %p51, %p52
    %p54 = scmp.ne.s32.totalorder %s45, %s46
    %p55 = scmp.eq.s32.totalorder %s14, 0
    %p56 = por %p54, %p55
    %p57 = scmp.ne.s32.totalorder %s45, %s46
    %p58 = scmp.eq.s32.totalorder %s15, 1
    %p59 = por %p57, %p58
    %p61 = scmp.ne.s32.totalorder %s46, %s60
    %p62 = scmp.eq.s32.totalorder %s15, 0
    %p63 = por %p61, %p62
    %s65 = sadd.s32 %s64, 1
    %p68 = scmp.eq.s32.totalorder %s9, 1
    %p69 = scmp.ne.s32.totalorder %s64, %s66
    %p70 = scmp.eq.s32.totalorder %s9, 0
    %p71 = por %p69, %p70
    %p72 = scmp.ne.s32.totalorder %s64, %s66
    %p73 = scmp.eq.s32.totalorder %s14, 1
    %p74 = por %p72, %p73
    %p75 = scmp.ne.s32.totalorder %s66, %s67
    %p76 = scmp.eq.s32.totalorder %s14, 0
    %p77 = por %p75, %p76
    %p78 = scmp.ne.s32.totalorder %s66, %s67
    %p79 = scmp.eq.s32.totalorder %s15, 1
    %p80 = por %p78, %p79
    %p82 = scmp.ne.s32.totalorder %s67, %s81
    %p83 = scmp.eq.s32.totalorder %s15, 0
    %p84 = por %p82, %p83
    %s85 = ssub.s32 %s9, %s16
    %p86 = scmp.eq.s32.totalorder %s85, 0
    %s88 = sadd.s32 %s87, 1
    %s89 = scalar_select %p86, %s87, %s88
    %p92 = pneg %p86
    %p93 = scmp.eq.s32.totalorder %s9, 1
    %p94 = por %p92, %p93
    %p95 = scmp.ne.s32.totalorder %s87, %s90
    %p96 = scmp.eq.s32.totalorder %s9, 0
    %p97 = por %p95, %p96
    %p98 = scmp.ne.s32.totalorder %s87, %s90
    %p99 = scmp.eq.s32.totalorder %s14, 1
    %p100 = por %p98, %p99
    %p101 = scmp.ne.s32.totalorder %s90, %s91
    %p102 = scmp.eq.s32.totalorder %s14, 0
    %p103 = por %p101, %p102
    %p104 = scmp.ne.s32.totalorder %s90, %s91
    %p105 = scmp.eq.s32.totalorder %s15, 1
    %p106 = por %p104, %p105
    %p108 = scmp.ne.s32.totalorder %s91, %s107
    %p109 = scmp.eq.s32.totalorder %s15, 0
    %p110 = por %p108, %p109
    %p111 = scmp.le.s32.totalorder 1, %s9
    %p112 = scmp.lt.s32.totalorder %s9, 3
    %p113 = pnand %p111, %p112
    %p114 = pneg %p113
    // Predicated region
    $region9: #{example_net_forward.4} parent=5 // pred_check
      _
    $region10: #{example_net_forward.4} parent=5 // pred_check_branch
      %116 = sbr.rel (%p113) target = $region12
    $region11: #{example_net_forward.4} parent=5 // pred_region
      %s117 = ssub.s32 %s9, 1
      // Predicated region
      $region13: #{example_net_forward.4} parent=11 // pred_check
        %p118 = pneg %p56
      $region14: #{example_net_forward.4} parent=11 // pred_check_branch
        %120 = sbr.rel (%p118) target = $region16
      $region15: #{example_net_forward.4} parent=11 // pred_region
        _
      $region16: #{example_net_forward.4} parent=11 // pred_fallthru
        _
      // Predicated region
      $region17: #{example_net_forward.4} parent=11 // pred_check
        %p121 = pneg %p77
      $region18: #{example_net_forward.4} parent=11 // pred_check_branch
        %123 = sbr.rel (%p121) target = $region20
      $region19: #{example_net_forward.4} parent=11 // pred_region
        _
      $region20: #{example_net_forward.4} parent=11 // pred_fallthru
        _
    $region12: #{example_net_forward.4} parent=5 // pred_fallthru
      _
    %p124 = scmp.lt.s32.totalorder %s9, 2
    // Predicated region
    $region21: #{example_net_forward.4} parent=5 // pred_check
      %p125 = pneg %p124
    $region22: #{example_net_forward.4} parent=5 // pred_check_branch
      %127 = sbr.rel (%p125) target = $region24
    $region23: #{example_net_forward.4} parent=5 // pred_region
      // Predicated region
      $region25: #{example_net_forward.4} parent=23 // pred_check
        %p128 = pneg %p29
      $region26: #{example_net_forward.4} parent=23 // pred_check_branch
        %130 = sbr.rel (%p128) target = $region28
      $region27: #{example_net_forward.4} parent=23 // pred_region
        %p131 = scmp.lt.s32.totalorder %s9, 1
        %s132 = scalar_select %p131, %s9, 1
        %s133 = smul.addr %s132, 16
        %s134 = smul.addr %s133, 4
        %s135 = scalar_lea.vmem %s0, %s134
      $region28: #{example_net_forward.4} parent=23 // pred_fallthru
        _
    $region24: #{example_net_forward.4} parent=5 // pred_fallthru
      _
    %p136 = scmp.le.s32.totalorder 1, %s9
    %p137 = scmp.lt.s32.totalorder %s9, 3
    %p138 = pnand %p136, %p137
    %p139 = pneg %p138
    // Predicated region
    $region29: #{example_net_forward.4} parent=5 // pred_check
      _
    $region30: #{example_net_forward.4} parent=5 // pred_check_branch
      %141 = sbr.rel (%p138) target = $region32
    $region31: #{example_net_forward.4} parent=5 // pred_region
      %s142 = ssub.s32 %s9, 1
      %p143 = scmp.lt.s32.totalorder %s14, 1
      %s144 = scalar_select %p143, %s14, 1
      %s145 = smul.addr %s144, 16
      %s146 = smul.addr %s145, 4
      %s147 = scalar_lea.vmem %s0, %s146
      %p148 = pneg %p35
      %p149 = pneg %p32
      %p150 = pneg %p56
      %p151 = pneg %p53
      %p152 = pneg %p77
      %p153 = pneg %p74
      %p154 = pneg %p103
      %p155 = pneg %p100
      %p156 = scmp.lt.s32.totalorder %s14, 1
      %s157 = scalar_select %p156, %s14, 1
      %s158 = smul.addr %s157, 2
      %s159 = smul.addr %s158, 4
      %s160 = scalar_lea.vmem %s3, %s159
      %p161 = scmp.lt.s32.totalorder %s14, 1
      %s162 = scalar_select %p161, %s14, 1
      %s163 = smul.addr %s162, 16
      %s164 = smul.addr %s163, 4
      %s165 = scalar_lea.vmem %s0, %s164
      %p166 = scmp.lt.s32.totalorder %s14, 1
      %s167 = scalar_select %p166, %s14, 1
      %s168 = smul.addr %s167, 2
      %s169 = smul.addr %s168, 4
      %s170 = scalar_lea.vmem %s3, %s169
      %v172 = vld [vmem:[%s165] sm:$0xff]
      %v173 = vld [vmem:[%s165 + $0x8] sm:$0xff]
      %v174 = vld [vmem:[%s165 + $0x10] sm:$0xff]
      %v175 = vld [vmem:[%s165 + $0x18] sm:$0xff]
      %v176 = vld [vmem:[%s165 + $0x20] sm:$0xff]
      %v177 = vld [vmem:[%s165 + $0x28] sm:$0xff]
      %v178 = vld [vmem:[%s165 + $0x30] sm:$0xff]
      %v179 = vld [vmem:[%s165 + $0x38] sm:$0xff]
      %v180 = vld [vmem:[%s1] sm:$0xf]
      %v181 = vld [vmem:[%s1 + $0x4] sm:$0xf]
      %v182 = vld [vmem:[%s1 + $0x8] sm:$0xf]
      %v183 = vld [vmem:[%s1 + $0xc] sm:$0xf]
      %v184 = vld [vmem:[%s1 + $0x10] sm:$0xf]
      %v185 = vld [vmem:[%s1 + $0x14] sm:$0xf]
      %v186 = vld [vmem:[%s1 + $0x18] sm:$0xf]
      %v187 = vld [vmem:[%s1 + $0x1c] sm:$0xf]
      %v188 = vld [vmem:[%s1 + $0x20] sm:$0xf]
      %v189 = vld [vmem:[%s1 + $0x24] sm:$0xf]
      %v190 = vld [vmem:[%s1 + $0x28] sm:$0xf]
      %v191 = vld [vmem:[%s1 + $0x2c] sm:$0xf]
      %v192 = vld [vmem:[%s1 + $0x30] sm:$0xf]
      %v193 = vld [vmem:[%s1 + $0x34] sm:$0xf]
      %v194 = vld [vmem:[%s1 + $0x38] sm:$0xf]
      %v195 = vld [vmem:[%s1 + $0x3c] sm:$0xf]
      %v196 = vld [vmem:[%s1 + $0x40] sm:$0xf]
      %v197 = vld [vmem:[%s1 + $0x44] sm:$0xf]
      %v198 = vld [vmem:[%s1 + $0x48] sm:$0xf]
      %v199 = vld [vmem:[%s1 + $0x4c] sm:$0xf]
      %v200 = vld [vmem:[%s2] sm:$0x1]
      %v202 = vperm.slane %v200, 0
      %v212 = vunpack.c.l.b16 %v172
      %v213 = vunpack.c.h.b16 %v172
      %v214 = vunpack.c.l.b16 %v173
      %v215 = vunpack.c.h.b16 %v173
      %v216 = vunpack.c.l.b16 %v174
      %v217 = vunpack.c.h.b16 %v174
      %v218 = vunpack.c.l.b16 %v175
      %v219 = vunpack.c.h.b16 %v175
      %v220 = vunpack.c.l.b16 %v176
      %v221 = vunpack.c.h.b16 %v176
      %v222 = vunpack.c.l.b16 %v177
      %v223 = vunpack.c.h.b16 %v177
      %v224 = vunpack.c.l.b16 %v178
      %v225 = vunpack.c.h.b16 %v178
      %v226 = vunpack.c.l.b16 %v179
      %v227 = vunpack.c.h.b16 %v179
      %v228 = vpack.c.b16 %v214, %v212
      %v229 = vpack.c.b16 %v215, %v213
      %v230 = vpack.c.b16 %v218, %v216
      %v231 = vpack.c.b16 %v219, %v217
      %v232 = vpack.c.b16 %v222, %v220
      %v233 = vpack.c.b16 %v223, %v221
      %v234 = vpack.c.b16 %v226, %v224
      %v235 = vpack.c.b16 %v227, %v225
      %v260 = vunpack.c.l.b16 %v180
      %v261 = vunpack.c.l.b16 %v181
      %v262 = vunpack.c.l.b16 %v182
      %v263 = vunpack.c.l.b16 %v183
      %v264 = vunpack.c.l.b16 %v184
      %v265 = vunpack.c.l.b16 %v185
      %v266 = vunpack.c.l.b16 %v186
      %v267 = vunpack.c.l.b16 %v187
      %v268 = vunpack.c.l.b16 %v188
      %v269 = vunpack.c.l.b16 %v189
      %v270 = vunpack.c.l.b16 %v190
      %v271 = vunpack.c.l.b16 %v191
      %v272 = vunpack.c.l.b16 %v192
      %v273 = vunpack.c.l.b16 %v193
      %v274 = vunpack.c.l.b16 %v194
      %v275 = vunpack.c.l.b16 %v195
      %v276 = vunpack.c.l.b16 %v196
      %v277 = vunpack.c.l.b16 %v197
      %v278 = vunpack.c.l.b16 %v198
      %v279 = vunpack.c.l.b16 %v199
      %v280 = vpack.c.b16 %v261, %v260
      %v281 = vpack.c.b16 %v263, %v262
      %v282 = vpack.c.b16 %v265, %v264
      %v283 = vpack.c.b16 %v267, %v266
      %v284 = vpack.c.b16 %v269, %v268
      %v285 = vpack.c.b16 %v271, %v270
      %v286 = vpack.c.b16 %v273, %v272
      %v287 = vpack.c.b16 %v275, %v274
      %v288 = vpack.c.b16 %v277, %v276
      %v289 = vpack.c.b16 %v279, %v278
      %vm300 = vcmask 261120
      %v302 = vsel %vm300, %v229, 0
      %v305 = vsel %vm300, %v231, 0
      %v308 = vsel %vm300, %v233, 0
      %v311 = vsel %vm300, %v235, 0
      %313 = vmatpush.bf16.msra.mxu0 %v287
      %314 = vmatpush.bf16.msra.mxu0 %v286
      %315 = vmatpush.bf16.msra.mxu0 %v285
      %316 = vmatpush.bf16.msra.mxu0 %v284
      %317 = vmatpush.bf16.msra.mxu0 %v283
      %318 = vmatpush.bf16.msra.mxu0 %v282
      %319 = vmatpush.bf16.msra.mxu0 %v281
      %320 = vmatpush.bf16.msra.mxu0 %v280
      %321 = vmatmul.bf16.gmra.mxu0 %v228
      %v322 = vpop.f32.mrf.mxu0
      %v323 = vadd.f32 %v202, %v322
      %v324 = vpop.f32.mrf.mxu0
      %v325 = vadd.f32 %v202, %v324
      %326 = vmatmul.bf16.gmra.mxu0 %v230
      %v327 = vpop.f32.mrf.mxu0
      %v328 = vadd.f32 %v202, %v327
      %v329 = vpop.f32.mrf.mxu0
      %v330 = vadd.f32 %v202, %v329
      %331 = vmatmul.bf16.gmra.mxu0 %v232
      %v332 = vpop.f32.mrf.mxu0
      %v333 = vadd.f32 %v202, %v332
      %v334 = vpop.f32.mrf.mxu0
      %v335 = vadd.f32 %v202, %v334
      %336 = vmatmul.bf16.gmra.mxu0 %v234
      %v337 = vpop.f32.mrf.mxu0
      %v338 = vadd.f32 %v202, %v337
      %v339 = vpop.f32.mrf.mxu0
      %v340 = vadd.f32 %v202, %v339
      %341 = vdwg.mxu0
      %342 = vmatpush.bf16.msra.mxu0 0
      %343 = vmatpush.bf16.msra.mxu0 0
      %344 = vmatpush.bf16.msra.mxu0 0
      %345 = vmatpush.bf16.msra.mxu0 0
      %346 = vmatpush.bf16.msra.mxu0 0
      %347 = vmatpush.bf16.msra.mxu0 0
      %348 = vmatpush.bf16.msra.mxu0 %v289
      %349 = vmatpush.bf16.msra.mxu0 %v288
      %350 = vmatmul.bf16.gmra.mxu0 %v302
      %v351 = vpop.f32.mrf.mxu0
      %v352 = vadd.f32 %v323, %v351
      %v353 = vpop.f32.mrf.mxu0
      %v354 = vadd.f32 %v325, %v353
      %355 = vmatmul.bf16.gmra.mxu0 %v305
      %v356 = vpop.f32.mrf.mxu0
      %v357 = vadd.f32 %v328, %v356
      %v358 = vpop.f32.mrf.mxu0
      %v359 = vadd.f32 %v330, %v358
      %360 = vmatmul.bf16.gmra.mxu0 %v308
      %v361 = vpop.f32.mrf.mxu0
      %v362 = vadd.f32 %v333, %v361
      %v363 = vpop.f32.mrf.mxu0
      %v364 = vadd.f32 %v335, %v363
      %365 = vmatmul.bf16.gmra.mxu0 %v311
      %v366 = vpop.f32.mrf.mxu0
      %v367 = vadd.f32 %v338, %v366
      %v368 = vpop.f32.mrf.mxu0
      %v369 = vadd.f32 %v340, %v368
      %370 = vdwg.mxu0
      %v371 = vmax.f32 %v352, 0.0
      %v372 = vmax.f32 %v354, 0.0
      %v373 = vmax.f32 %v357, 0.0
      %v374 = vmax.f32 %v359, 0.0
      %v375 = vmax.f32 %v362, 0.0
      %v376 = vmax.f32 %v364, 0.0
      %v377 = vmax.f32 %v367, 0.0
      %v378 = vmax.f32 %v369, 0.0
      %v379 = vmax.f32 %v371, %v373
      %v380 = vmax.f32 %v372, %v374
      %v381 = vmax.f32 %v375, %v377
      %v382 = vmax.f32 %v376, %v378
      %v383 = vmax.f32 %v379, %v381
      %v384 = vmax.f32 %v380, %v382
      %v385 = vpack.c.bf16 %v383, %v383
      %v386 = vpack.c.bf16 %v384, %v384
      %387 = vst [vmem:[%s170] sm:$0xf] %v385
      %388 = vst [vmem:[%s170 + $0x4] sm:$0xf] %v386
      %p389 = scmp.lt.s32.totalorder %s14, 1
      %s390 = scalar_select %p389, %s14, 1
      %s391 = smul.addr %s390, 2
      %s392 = smul.addr %s391, 4
      %s393 = scalar_lea.vmem %s3, %s392
      // Predicated region
      $region33: #{example_net_forward.4} parent=31 // pred_check
        %p394 = pneg %p100
      $region34: #{example_net_forward.4} parent=31 // pred_check_branch
        %396 = sbr.rel (%p394) target = $region36
      $region35: #{example_net_forward.4} parent=31 // pred_region
        _
      $region36: #{example_net_forward.4} parent=31 // pred_fallthru
        _
    $region32: #{example_net_forward.4} parent=5 // pred_fallthru
      _
    %p397 = scmp.le.s32.totalorder 2, %s9
    // Predicated region
    $region37: #{example_net_forward.4} parent=5 // pred_check
      %p398 = pneg %p397
    $region38: #{example_net_forward.4} parent=5 // pred_check_branch
      %400 = sbr.rel (%p398) target = $region40
    $region39: #{example_net_forward.4} parent=5 // pred_region
      %s401 = ssub.s32 %s9, 2
      // Predicated region
      $region41: #{example_net_forward.4} parent=39 // pred_check
        %p402 = pneg %p106
      $region42: #{example_net_forward.4} parent=39 // pred_check_branch
        %404 = sbr.rel (%p402) target = $region44
      $region43: #{example_net_forward.4} parent=39 // pred_region
        %p405 = scmp.lt.s32.totalorder %s15, 1
        %s406 = scalar_select %p405, %s15, 1
        %s407 = smul.addr %s406, 2
        %s408 = smul.addr %s407, 4
        %s409 = scalar_lea.vmem %s3, %s408
      $region44: #{example_net_forward.4} parent=39 // pred_fallthru
        _
    $region40: #{example_net_forward.4} parent=5 // pred_fallthru
      _
  $region6: #{example_net_forward.4} parent=0 // loop_footer
    %s13 = sadd.s32 1, %s9
  $region7: #{example_net_forward.4} parent=0 // loop_footer_branch
    %8 = sbr.rel target = $region3
  $region8: #{example_net_forward.4} parent=0 // loop_exit
    _

// kernel: example_net_forward.5
$region0: #{example_net_forward.5}
  #allocation0 [shape = 'u32[]', space=smem, size = 0x4, offset = 0x4, fixed_abs, tag = 'smem constant byte address 0x4 - core index']
  #allocation1 [shape = 'u32[72,128]{1,0:T(1,128)}', space=vmem, size = 0x9000, scoped, tag = 'internal scratch']
  %s0 = inlined_call_operand.vmem [shape: bf16[2,256], index: 0, kind: input, shape index: {}]
  %s1 = inlined_call_operand.vmem [shape: bf16[256,128], index: 1, kind: input, shape index: {}]
  %s2 = inlined_call_operand.vmem [shape: f32[1,128], index: 2, kind: input, shape index: {}]
  %s3 = inlined_call_operand.vmem [shape: bf16[128,128], index: 3, kind: input, shape index: {}]
  %s4 = inlined_call_operand.vmem [shape: f32[1,128], index: 4, kind: input, shape index: {}]
  %s5 = inlined_call_operand.vmem [shape: bf16[128,128], index: 5, kind: input, shape index: {}]
  %s6 = inlined_call_operand.vmem [shape: f32[1,128], index: 6, kind: input, shape index: {}]
  %s7 = inlined_call_operand.hbm [shape: f32[2,128], index: 7, kind: output, shape index: {}]
  %s8 = sld [smem:[#allocation0]]
  $region38: #{example_net_forward.5} parent=0
    _
  %s10 = ssub.s32 1, %s8
  %s11 = scalar_select 0, %s10, %s8
  $region1: #{example_net_forward.5} parent=0
    #allocation2 [shape = 'u8[1024]{0}', space=vmem, size = 0x400, scoped, tag = 'output window, operand 0, single buffered']
    #allocation3 [shape = 's32[1]{0}', space=sflag, size = 0x4, scoped, tag = 'scoped memory for example_net_forward.5']
    %12 = vsyncpa [#allocation3], 0
    // Predicated region
    $region2: #{example_net_forward.5} parent=1 // pred_check
      _
    $region3: #{example_net_forward.5} parent=1 // pred_check_branch
      %14 = sbr.rel (0) target = $region5
    $region4: #{example_net_forward.5} parent=1 // pred_region
      _
    $region5: #{example_net_forward.5} parent=1 // pred_fallthru
      _
    // Predicated region
    $region6: #{example_net_forward.5} parent=1 // pred_check
      _
    $region7: #{example_net_forward.5} parent=1 // pred_check_branch
      %16 = sbr.rel (0) target = $region9
    $region8: #{example_net_forward.5} parent=1 // pred_region
      _
    $region9: #{example_net_forward.5} parent=1 // pred_fallthru
      _
    // Predicated region
    $region10: #{example_net_forward.5} parent=1 // pred_check
      _
    $region11: #{example_net_forward.5} parent=1 // pred_check_branch
      %18 = sbr.rel (0) target = $region13
    $region12: #{example_net_forward.5} parent=1 // pred_region
      _
    $region13: #{example_net_forward.5} parent=1 // pred_fallthru
      _
    // Predicated region
    $region14: #{example_net_forward.5} parent=1 // pred_check
      _
    $region15: #{example_net_forward.5} parent=1 // pred_check_branch
      %20 = sbr.rel (0) target = $region17
    $region16: #{example_net_forward.5} parent=1 // pred_region
      _
    $region17: #{example_net_forward.5} parent=1 // pred_fallthru
      _
    // Predicated region
    $region18: #{example_net_forward.5} parent=1 // pred_check
      _
    $region19: #{example_net_forward.5} parent=1 // pred_check_branch
      %22 = sbr.rel (0) target = $region21
    $region20: #{example_net_forward.5} parent=1 // pred_region
      _
    $region21: #{example_net_forward.5} parent=1 // pred_fallthru
      _
    // Predicated region
    $region22: #{example_net_forward.5} parent=1 // pred_check
      _
    $region23: #{example_net_forward.5} parent=1 // pred_check_branch
      %24 = sbr.rel (0) target = $region25
    $region24: #{example_net_forward.5} parent=1 // pred_region
      _
    $region25: #{example_net_forward.5} parent=1 // pred_fallthru
      _
    // Predicated region
    $region26: #{example_net_forward.5} parent=1 // pred_check
      _
    $region27: #{example_net_forward.5} parent=1 // pred_check_branch
      %26 = sbr.rel (0) target = $region29
    $region28: #{example_net_forward.5} parent=1 // pred_region
      _
    $region29: #{example_net_forward.5} parent=1 // pred_fallthru
      _
    %v27 = vld [vmem:[%s0] sm:$0x3]
    %v28 = vld [vmem:[%s1] sm:$0xf]
    %v29 = vld [vmem:[%s1 + $0x4] sm:$0xf]
    %v30 = vld [vmem:[%s1 + $0x8] sm:$0xf]
    %v31 = vld [vmem:[%s1 + $0xc] sm:$0xf]
    %v32 = vld [vmem:[%s1 + $0x10] sm:$0xf]
    %v33 = vld [vmem:[%s1 + $0x14] sm:$0xf]
    %v34 = vld [vmem:[%s1 + $0x18] sm:$0xf]
    %v35 = vld [vmem:[%s1 + $0x1c] sm:$0xf]
    %v36 = vld [vmem:[%s1 + $0x20] sm:$0xf]
    %v37 = vld [vmem:[%s1 + $0x24] sm:$0xf]
    %v38 = vld [vmem:[%s1 + $0x28] sm:$0xf]
    %v39 = vld [vmem:[%s1 + $0x2c] sm:$0xf]
    %v40 = vld [vmem:[%s1 + $0x30] sm:$0xf]
    %v41 = vld [vmem:[%s1 + $0x34] sm:$0xf]
    %v42 = vld [vmem:[%s1 + $0x38] sm:$0xf]
    %v43 = vld [vmem:[%s1 + $0x3c] sm:$0xf]
    %v44 = vld [vmem:[%s1 + $0x40] sm:$0xf]
    %v45 = vld [vmem:[%s1 + $0x44] sm:$0xf]
    %v46 = vld [vmem:[%s1 + $0x48] sm:$0xf]
    %v47 = vld [vmem:[%s1 + $0x4c] sm:$0xf]
    %v48 = vld [vmem:[%s1 + $0x50] sm:$0xf]
    %v49 = vld [vmem:[%s1 + $0x54] sm:$0xf]
    %v50 = vld [vmem:[%s1 + $0x58] sm:$0xf]
    %v51 = vld [vmem:[%s1 + $0x5c] sm:$0xf]
    %v52 = vld [vmem:[%s1 + $0x60] sm:$0xf]
    %v53 = vld [vmem:[%s1 + $0x64] sm:$0xf]
    %v54 = vld [vmem:[%s1 + $0x68] sm:$0xf]
    %v55 = vld [vmem:[%s1 + $0x6c] sm:$0xf]
    %v56 = vld [vmem:[%s1 + $0x70] sm:$0xf]
    %v57 = vld [vmem:[%s1 + $0x74] sm:$0xf]
    %v58 = vld [vmem:[%s1 + $0x78] sm:$0xf]
    %v59 = vld [vmem:[%s1 + $0x7c] sm:$0xf]
    %v60 = vld [vmem:[%s2] sm:$0x1]
    %v62 = vperm.slane %v60, 0
    %65 = vst [vmem:[#allocation1] ss:$9 sm:$0xff] %v27
    %v66 = vld [vmem:[#allocation1] sm:$0xff]
    %v67 = vld [vmem:[#allocation1 + $0x9] sm:$0xff]
    %v102 = vunpack.c.l.b16 %v28
    %v103 = vunpack.c.l.b16 %v29
    %v104 = vunpack.c.l.b16 %v30
    %v105 = vunpack.c.l.b16 %v31
    %v106 = vunpack.c.l.b16 %v32
    %v107 = vunpack.c.l.b16 %v33
    %v108 = vunpack.c.l.b16 %v34
    %v109 = vunpack.c.l.b16 %v35
    %v110 = vunpack.c.l.b16 %v36
    %v111 = vunpack.c.l.b16 %v37
    %v112 = vunpack.c.l.b16 %v38
    %v113 = vunpack.c.l.b16 %v39
    %v114 = vunpack.c.l.b16 %v40
    %v115 = vunpack.c.l.b16 %v41
    %v116 = vunpack.c.l.b16 %v42
    %v117 = vunpack.c.l.b16 %v43
    %v118 = vunpack.c.l.b16 %v44
    %v119 = vunpack.c.l.b16 %v45
    %v120 = vunpack.c.l.b16 %v46
    %v121 = vunpack.c.l.b16 %v47
    %v122 = vunpack.c.l.b16 %v48
    %v123 = vunpack.c.l.b16 %v49
    %v124 = vunpack.c.l.b16 %v50
    %v125 = vunpack.c.l.b16 %v51
    %v126 = vunpack.c.l.b16 %v52
    %v127 = vunpack.c.l.b16 %v53
    %v128 = vunpack.c.l.b16 %v54
    %v129 = vunpack.c.l.b16 %v55
    %v130 = vunpack.c.l.b16 %v56
    %v131 = vunpack.c.l.b16 %v57
    %v132 = vunpack.c.l.b16 %v58
    %v133 = vunpack.c.l.b16 %v59
    %v134 = vpack.c.b16 %v103, %v102
    %v135 = vpack.c.b16 %v105, %v104
    %v136 = vpack.c.b16 %v107, %v106
    %v137 = vpack.c.b16 %v109, %v108
    %v138 = vpack.c.b16 %v111, %v110
    %v139 = vpack.c.b16 %v113, %v112
    %v140 = vpack.c.b16 %v115, %v114
    %v141 = vpack.c.b16 %v117, %v116
    %v142 = vpack.c.b16 %v119, %v118
    %v143 = vpack.c.b16 %v121, %v120
    %v144 = vpack.c.b16 %v123, %v122
    %v145 = vpack.c.b16 %v125, %v124
    %v146 = vpack.c.b16 %v127, %v126
    %v147 = vpack.c.b16 %v129, %v128
    %v148 = vpack.c.b16 %v131, %v130
    %v149 = vpack.c.b16 %v133, %v132
    %166 = vmatpush.bf16.msra.mxu0 %v141
    %167 = vmatpush.bf16.msra.mxu0 %v140
    %168 = vmatpush.bf16.msra.mxu0 %v139
    %169 = vmatpush.bf16.msra.mxu0 %v138
    %170 = vmatpush.bf16.msra.mxu0 %v137
    %171 = vmatpush.bf16.msra.mxu0 %v136
    %172 = vmatpush.bf16.msra.mxu0 %v135
    %173 = vmatpush.bf16.msra.mxu0 %v134
    %174 = vmatmul.bf16.gmra.mxu0 %v66
    %v175 = vpop.f32.mrf.mxu0
    %v176 = vadd.f32 %v62, %v175
    %v177 = vpop.f32.mrf.mxu0
    %178 = vdwg.mxu0
    %179 = vmatpush.bf16.msra.mxu0 %v149
    %180 = vmatpush.bf16.msra.mxu0 %v148
    %181 = vmatpush.bf16.msra.mxu0 %v147
    %182 = vmatpush.bf16.msra.mxu0 %v146
    %183 = vmatpush.bf16.msra.mxu0 %v145
    %184 = vmatpush.bf16.msra.mxu0 %v144
    %185 = vmatpush.bf16.msra.mxu0 %v143
    %186 = vmatpush.bf16.msra.mxu0 %v142
    %187 = vmatmul.bf16.gmra.mxu0 %v67
    %v188 = vpop.f32.mrf.mxu0
    %v189 = vadd.f32 %v176, %v188
    %v190 = vpop.f32.mrf.mxu0
    %191 = vdwg.mxu0
    %v192 = vmax.f32 %v189, 0.0
    %v193 = vpack.c.bf16 %v192, %v192
    %v194 = vld [vmem:[%s3] sm:$0xf]
    %v195 = vld [vmem:[%s3 + $0x4] sm:$0xf]
    %v196 = vld [vmem:[%s3 + $0x8] sm:$0xf]
    %v197 = vld [vmem:[%s3 + $0xc] sm:$0xf]
    %v198 = vld [vmem:[%s3 + $0x10] sm:$0xf]
    %v199 = vld [vmem:[%s3 + $0x14] sm:$0xf]
    %v200 = vld [vmem:[%s3 + $0x18] sm:$0xf]
    %v201 = vld [vmem:[%s3 + $0x1c] sm:$0xf]
    %v202 = vld [vmem:[%s3 + $0x20] sm:$0xf]
    %v203 = vld [vmem:[%s3 + $0x24] sm:$0xf]
    %v204 = vld [vmem:[%s3 + $0x28] sm:$0xf]
    %v205 = vld [vmem:[%s3 + $0x2c] sm:$0xf]
    %v206 = vld [vmem:[%s3 + $0x30] sm:$0xf]
    %v207 = vld [vmem:[%s3 + $0x34] sm:$0xf]
    %v208 = vld [vmem:[%s3 + $0x38] sm:$0xf]
    %v209 = vld [vmem:[%s3 + $0x3c] sm:$0xf]
    %v210 = vld [vmem:[%s4] sm:$0x1]
    %v212 = vperm.slane %v210, 0
    %v230 = vunpack.c.l.b16 %v194
    %v231 = vunpack.c.l.b16 %v195
    %v232 = vunpack.c.l.b16 %v196
    %v233 = vunpack.c.l.b16 %v197
    %v234 = vunpack.c.l.b16 %v198
    %v235 = vunpack.c.l.b16 %v199
    %v236 = vunpack.c.l.b16 %v200
    %v237 = vunpack.c.l.b16 %v201
    %v238 = vunpack.c.l.b16 %v202
    %v239 = vunpack.c.l.b16 %v203
    %v240 = vunpack.c.l.b16 %v204
    %v241 = vunpack.c.l.b16 %v205
    %v242 = vunpack.c.l.b16 %v206
    %v243 = vunpack.c.l.b16 %v207
    %v244 = vunpack.c.l.b16 %v208
    %v245 = vunpack.c.l.b16 %v209
    %v246 = vpack.c.b16 %v231, %v230
    %v247 = vpack.c.b16 %v233, %v232
    %v248 = vpack.c.b16 %v235, %v234
    %v249 = vpack.c.b16 %v237, %v236
    %v250 = vpack.c.b16 %v239, %v238
    %v251 = vpack.c.b16 %v241, %v240
    %v252 = vpack.c.b16 %v243, %v242
    %v253 = vpack.c.b16 %v245, %v244
    %262 = vmatpush.bf16.msra.mxu0 %v253
    %263 = vmatpush.bf16.msra.mxu0 %v252
    %264 = vmatpush.bf16.msra.mxu0 %v251
    %265 = vmatpush.bf16.msra.mxu0 %v250
    %266 = vmatpush.bf16.msra.mxu0 %v249
    %267 = vmatpush.bf16.msra.mxu0 %v248
    %268 = vmatpush.bf16.msra.mxu0 %v247
    %269 = vmatpush.bf16.msra.mxu0 %v246
    %270 = vmatmul.bf16.gmra.mxu0 %v193
    %v271 = vpop.f32.mrf.mxu0
    %v272 = vadd.f32 %v212, %v271
    %v273 = vpop.f32.mrf.mxu0
    %274 = vdwg.mxu0
    %v275 = vmax.f32 %v272, 0.0
    %v276 = vpack.c.bf16 %v275, %v275
    %v277 = vld [vmem:[%s5] sm:$0xf]
    %v278 = vld [vmem:[%s5 + $0x4] sm:$0xf]
    %v279 = vld [vmem:[%s5 + $0x8] sm:$0xf]
    %v280 = vld [vmem:[%s5 + $0xc] sm:$0xf]
    %v281 = vld [vmem:[%s5 + $0x10] sm:$0xf]
    %v282 = vld [vmem:[%s5 + $0x14] sm:$0xf]
    %v283 = vld [vmem:[%s5 + $0x18] sm:$0xf]
    %v284 = vld [vmem:[%s5 + $0x1c] sm:$0xf]
    %v285 = vld [vmem:[%s5 + $0x20] sm:$0xf]
    %v286 = vld [vmem:[%s5 + $0x24] sm:$0xf]
    %v287 = vld [vmem:[%s5 + $0x28] sm:$0xf]
    %v288 = vld [vmem:[%s5 + $0x2c] sm:$0xf]
    %v289 = vld [vmem:[%s5 + $0x30] sm:$0xf]
    %v290 = vld [vmem:[%s5 + $0x34] sm:$0xf]
    %v291 = vld [vmem:[%s5 + $0x38] sm:$0xf]
    %v292 = vld [vmem:[%s5 + $0x3c] sm:$0xf]
    %v293 = vld [vmem:[%s6] sm:$0x1]
    %v295 = vperm.slane %v293, 0
    %v313 = vunpack.c.l.b16 %v277
    %v314 = vunpack.c.l.b16 %v278
    %v315 = vunpack.c.l.b16 %v279
    %v316 = vunpack.c.l.b16 %v280
    %v317 = vunpack.c.l.b16 %v281
    %v318 = vunpack.c.l.b16 %v282
    %v319 = vunpack.c.l.b16 %v283
    %v320 = vunpack.c.l.b16 %v284
    %v321 = vunpack.c.l.b16 %v285
    %v322 = vunpack.c.l.b16 %v286
    %v323 = vunpack.c.l.b16 %v287
    %v324 = vunpack.c.l.b16 %v288
    %v325 = vunpack.c.l.b16 %v289
    %v326 = vunpack.c.l.b16 %v290
    %v327 = vunpack.c.l.b16 %v291
    %v328 = vunpack.c.l.b16 %v292
    %v329 = vpack.c.b16 %v314, %v313
    %v330 = vpack.c.b16 %v316, %v315
    %v331 = vpack.c.b16 %v318, %v317
    %v332 = vpack.c.b16 %v320, %v319
    %v333 = vpack.c.b16 %v322, %v321
    %v334 = vpack.c.b16 %v324, %v323
    %v335 = vpack.c.b16 %v326, %v325
    %v336 = vpack.c.b16 %v328, %v327
    %345 = vmatpush.bf16.msra.mxu0 %v336
    %346 = vmatpush.bf16.msra.mxu0 %v335
    %347 = vmatpush.bf16.msra.mxu0 %v334
    %348 = vmatpush.bf16.msra.mxu0 %v333
    %349 = vmatpush.bf16.msra.mxu0 %v332
    %350 = vmatpush.bf16.msra.mxu0 %v331
    %351 = vmatpush.bf16.msra.mxu0 %v330
    %352 = vmatpush.bf16.msra.mxu0 %v329
    %353 = vmatmul.bf16.gmra.mxu0 %v276
    %v354 = vpop.f32.mrf.mxu0
    %v355 = vadd.f32 %v295, %v354
    %v356 = vpop.f32.mrf.mxu0
    %357 = vdwg.mxu0
    %358 = vst [vmem:[#allocation2] sm:$0x3] %v355
    // Predicated region
    $region30: #{example_net_forward.5} parent=1 // pred_check
      _
    $region31: #{example_net_forward.5} parent=1 // pred_check_branch
      %360 = sbr.rel (0) target = $region33
    $region32: #{example_net_forward.5} parent=1 // pred_region
      %362 = vsyncadd [#allocation3], 0
      %s364 = sshll.u32 [#allocation2], 4
      %s365 = int_to_ptr.vmem [resolvable:$true] %s364
      %s366 = sshll.u32 %s7, 4
      %s367 = int_to_ptr.hbm [resolvable:$true] %s366
      %369 = dma.vmem_to_hbm [thread:$0]  %s365, 32, %s367, [#allocation3]
    $region33: #{example_net_forward.5} parent=1 // pred_fallthru
      _
    // Predicated region
    $region34: #{example_net_forward.5} parent=1 // pred_check
      _
    $region35: #{example_net_forward.5} parent=1 // pred_check_branch
      %371 = sbr.rel (0) target = $region37
    $region36: #{example_net_forward.5} parent=1 // pred_region
      %373 = dma.done [#allocation3], 32
    $region37: #{example_net_forward.5} parent=1 // pred_fallthru
      _
    %374 = vsyncpa [#allocation3], 1

</llo_original>
